<compile_context>
chip_gen: v7x
topology: tpu7x:2x2x1
jax: 0.10.0
libtpu: 0.0.40
codegen_flags: <defaults>
</compile_context>

<pallas_src>
import functools

import jax
import jax.numpy as jnp
from jax.experimental import pallas as pl
from jax.experimental.pallas import tpu as pltpu

BLOCK_SIZE = 50                    # matches the PyTorch global `block_size`
LN_EPS = 1e-5
VMEM_LIMIT = 48 * 1024 * 1024      # leaves headroom on v7x's 64 MiB VMEM


def _round_up(n, m):
    return ((n + m - 1) // m) * m


def _ffn_row_tile(n_rows, t_pad, max_rows=512):
    """Largest multiple of t_pad that divides n_rows and is <= max_rows."""
    b = n_rows // t_pad
    best = 1
    for cand in range(1, b + 1):
        if b % cand == 0 and cand * t_pad <= max_rows:
            best = cand
    return best * t_pad


# ----------------------------------------------------------------------------
# Kernel 1: fused multi-head attention (+relative bias) + out-proj + add + LN1
#           one grid step per batch element; weights fetched once (constant
#           block index across the grid).
# ----------------------------------------------------------------------------
def _attn_ln1_kernel(x_ref, wqkv_ref, relt_ref, wproj_ref, bproj_ref,
                     g1_ref, b1_ref, o_ref,
                     qkv_scr, qr_scr, bias_scr, attn_scr,
                     *, n_head, head_dim, seq_pad, block_size):
    t = seq_pad
    x = x_ref[...]                                          # (T, C) f32
    xb = x.astype(jnp.bfloat16)

    # Fused QKV projection for all heads on the MXU: (T, C) @ (C, 3C).
    qkv_scr[...] = jnp.dot(xb, wqkv_ref[...],
                           preferred_element_type=jnp.float32)

    row = jax.lax.broadcasted_iota(jnp.int32, (t, t), 0)
    col = jax.lax.broadcasted_iota(jnp.int32, (t, t), 1)
    causal = col <= row
    scale = float(head_dim) ** -0.5

    for h in range(n_head):
        q = qkv_scr[:, h * head_dim:(h + 1) * head_dim]                  # (T, D)
        k = qkv_scr[:, (n_head + h) * head_dim:(n_head + h + 1) * head_dim]
        v = qkv_scr[:, (2 * n_head + h) * head_dim:
                    (2 * n_head + h + 1) * head_dim]
        qb = q.astype(jnp.bfloat16)

        # Content scores (scaled) on the MXU.
        wei = jnp.dot(qb, k.astype(jnp.bfloat16).T,
                      preferred_element_type=jnp.float32) * scale        # (T, T)

        # Relative-position bias via the skew trick:
        #   qr[i, r]  = q[i, :] . rel_table[r, :]        (MXU matmul, (T, Wp))
        #   bias[i,j] = qr[i, j - i + block_size - 1]
        # i.e. row i of the bias is a contiguous slice of row i of qr starting
        # at column (block_size - 1 - i); materialized row-by-row with static
        # offsets through a small VMEM scratch (no O(T^2*D) tensor anywhere).
        qr_scr[...] = jnp.dot(qb, relt_ref[h],
                              preferred_element_type=jnp.float32)        # (T, Wp)
        for i in range(t):
            start = max(block_size - 1 - i, 0)     # clamp only for padded rows
            bias_scr[i:i + 1, :] = qr_scr[i:i + 1, start:start + t]
        wei = wei + bias_scr[...]

        # Causal mask + softmax (f32; reciprocal goes to the EUP slot).
        wei = jnp.where(causal, wei, jnp.float32(-1e30))
        wei = wei - jnp.max(wei, axis=-1, keepdims=True)
        p = jnp.exp(wei)
        p = p * pl.reciprocal(jnp.sum(p, axis=-1, keepdims=True), approx=True)

        attn_scr[:, h * head_dim:(h + 1) * head_dim] = jnp.dot(
            p.astype(jnp.bfloat16), v.astype(jnp.bfloat16),
            preferred_element_type=jnp.float32)                          # (T, D)

    # Output projection (+bias), residual, LayerNorm-1 -- lane-dense (T, C).
    attn = attn_scr[...]
    sa = jnp.dot(attn.astype(jnp.bfloat16), wproj_ref[...],
                 preferred_element_type=jnp.float32) + bproj_ref[...]
    h1 = x + sa
    mean = jnp.mean(h1, axis=-1, keepdims=True)
    var = jnp.mean(jnp.square(h1 - mean), axis=-1, keepdims=True)
    h1n = (h1 - mean) * jax.lax.rsqrt(var + LN_EPS)
    o_ref[...] = (h1n * g1_ref[...] + b1_ref[...]).astype(o_ref.dtype)


# ----------------------------------------------------------------------------
# Kernel 2: fused FeedForward (both sub-blocks) + residual + LayerNorm-2,
#           tiled over rows; the 4C hidden activation stays in VMEM.
# ----------------------------------------------------------------------------
def _ffn_ln2_kernel(h_ref, w1a_ref, b1a_ref, w2a_ref, b2a_ref,
                    w1b_ref, b1b_ref, w2b_ref, b2b_ref,
                    g2_ref, be2_ref, o_ref):
    h = h_ref[...]                                          # (TM, C) f32
    # FFN sub-block 1: Linear -> ReLU -> Linear
    f = jnp.dot(h.astype(jnp.bfloat16), w1a_ref[...],
                preferred_element_type=jnp.float32) + b1a_ref[...]
    f = jnp.maximum(f, 0.0)
    f = jnp.dot(f.astype(jnp.bfloat16), w2a_ref[...],
                preferred_element_type=jnp.float32) + b2a_ref[...]
    # FFN sub-block 2: Linear -> ReLU -> Linear
    f = jnp.dot(f.astype(jnp.bfloat16), w1b_ref[...],
                preferred_element_type=jnp.float32) + b1b_ref[...]
    f = jnp.maximum(f, 0.0)
    f = jnp.dot(f.astype(jnp.bfloat16), w2b_ref[...],
                preferred_element_type=jnp.float32) + b2b_ref[...]
    # Residual + LayerNorm-2
    y = h + f
    mean = jnp.mean(y, axis=-1, keepdims=True)
    var = jnp.mean(jnp.square(y - mean), axis=-1, keepdims=True)
    yn = (y - mean) * jax.lax.rsqrt(var + LN_EPS)
    o_ref[...] = (yn * g2_ref[...] + be2_ref[...]).astype(o_ref.dtype)


# ----------------------------------------------------------------------------
# Parameters (deterministic, in-script init) and Block forward
# ----------------------------------------------------------------------------
def init_params(key, n_embd, n_head):
    D = n_embd // n_head
    hidden = 4 * n_embd
    ks = list(jax.random.split(key, 16))

    def lin(k, fan_in, fan_out):
        bound = 1.0 / (fan_in ** 0.5)
        kw, kb = jax.random.split(k)
        w = jax.random.uniform(kw, (fan_in, fan_out), jnp.float32, -bound, bound)
        b = jax.random.uniform(kb, (fan_out,), jnp.float32, -bound, bound)
        return w, b

    bound = 1.0 / (n_embd ** 0.5)
    wq = jax.random.uniform(ks[0], (n_head, n_embd, D), jnp.float32, -bound, bound)
    wk = jax.random.uniform(ks[1], (n_head, n_embd, D), jnp.float32, -bound, bound)
    wv = jax.random.uniform(ks[2], (n_head, n_embd, D), jnp.float32, -bound, bound)
    rel = jax.random.normal(ks[3], (n_head, 2 * BLOCK_SIZE - 1, D), jnp.float32)

    proj_w, proj_b = lin(ks[4], n_head * D, n_embd)
    ffn = []
    for i in range(2):  # num_layers=2 in FeedFoward
        w1, b1 = lin(ks[5 + 2 * i], n_embd, hidden)
        w2, b2 = lin(ks[6 + 2 * i], hidden, n_embd)
        ffn.append((w1, b1, w2, b2))

    return dict(
        wq=wq, wk=wk, wv=wv, rel_pos_emb=rel,
        proj_w=proj_w, proj_b=proj_b, ffn=ffn,
        ln1_g=jnp.ones((n_embd,), jnp.float32),
        ln1_b=jnp.zeros((n_embd,), jnp.float32),
        ln2_g=jnp.ones((n_embd,), jnp.float32),
        ln2_b=jnp.zeros((n_embd,), jnp.float32),
    )


def block_forward(x, params):
    B, T, C = x.shape
    H, _, D = params["wq"].shape
    assert H * D == C and T <= BLOCK_SIZE

    Tp = _round_up(T, 8)
    w_rel = 2 * BLOCK_SIZE - 1
    Wp = _round_up(max(w_rel, BLOCK_SIZE - 1 + Tp), 128)

    # --- fold parameters into MXU-friendly (bf16) layouts (one-time glue) ----
    wq = jnp.transpose(params["wq"], (1, 0, 2)).reshape(C, C)
    wk = jnp.transpose(params["wk"], (1, 0, 2)).reshape(C, C)
    wv = jnp.transpose(params["wv"], (1, 0, 2)).reshape(C, C)
    w_qkv = jnp.concatenate([wq, wk, wv], axis=1).astype(jnp.bfloat16)  # (C, 3C)

    rel = jnp.pad(params["rel_pos_emb"], ((0, 0), (0, Wp - w_rel), (0, 0)))
    rel_t = jnp.transpose(rel, (0, 2, 1)).astype(jnp.bfloat16)          # (H, D, Wp)

    w_proj = params["proj_w"].astype(jnp.bfloat16)
    b_proj = params["proj_b"].reshape(1, C).astype(jnp.float32)
    ln1_g = params["ln1_g"].reshape(1, C).astype(jnp.float32)
    ln1_b = params["ln1_b"].reshape(1, C).astype(jnp.float32)
    ln2_g = params["ln2_g"].reshape(1, C).astype(jnp.float32)
    ln2_b = params["ln2_b"].reshape(1, C).astype(jnp.float32)

    (w1a, b1a, w2a, b2a), (w1b, b1b, w2b, b2b) = params["ffn"]
    hid = w1a.shape[1]
    w1a_b, w2a_b = w1a.astype(jnp.bfloat16), w2a.astype(jnp.bfloat16)
    w1b_b, w2b_b = w1b.astype(jnp.bfloat16), w2b.astype(jnp.bfloat16)
    b1a_r = b1a.reshape(1, hid).astype(jnp.float32)
    b2a_r = b2a.reshape(1, C).astype(jnp.float32)
    b1b_r = b1b.reshape(1, hid).astype(jnp.float32)
    b2b_r = b2b.reshape(1, C).astype(jnp.float32)

    # --- pad sequence to a sublane multiple and flatten rows -----------------
    xp = jnp.pad(x.astype(jnp.float32), ((0, 0), (0, Tp - T), (0, 0)))
    xp = xp.reshape(B * Tp, C)

    cparams = pltpu.CompilerParams(dimension_semantics=("parallel",),
                                   vmem_limit_bytes=VMEM_LIMIT)

    # --- kernel 1: fused MHA (+rel bias) + proj + residual + LN1 -------------
    h1 = pl.pallas_call(
        functools.partial(_attn_ln1_kernel, n_head=H, head_dim=D,
                          seq_pad=Tp, block_size=BLOCK_SIZE),
        out_shape=jax.ShapeDtypeStruct((B * Tp, C), jnp.float32),
        grid=(B,),
        in_specs=[
            pl.BlockSpec((Tp, C), lambda b: (b, 0)),        # x rows of batch b
            pl.BlockSpec((C, 3 * C), lambda b: (0, 0)),     # fused QKV weight
            pl.BlockSpec((H, D, Wp), lambda b: (0, 0, 0)),  # rel tables (all heads)
            pl.BlockSpec((C, C), lambda b: (0, 0)),         # output projection
            pl.BlockSpec((1, C), lambda b: (0, 0)),         # proj bias
            pl.BlockSpec((1, C), lambda b: (0, 0)),         # ln1 gamma
            pl.BlockSpec((1, C), lambda b: (0, 0)),         # ln1 beta
        ],
        out_specs=pl.BlockSpec((Tp, C), lambda b: (b, 0)),
        scratch_shapes=[
            pltpu.VMEM((Tp, 3 * C), jnp.float32),   # fused QKV activations
            pltpu.VMEM((Tp, Wp), jnp.float32),      # q @ rel^T
            pltpu.VMEM((Tp, Tp), jnp.float32),      # skewed relative bias
            pltpu.VMEM((Tp, C), jnp.float32),       # concatenated heads
        ],
        compiler_params=cparams,
    )(xp, w_qkv, rel_t, w_proj, b_proj, ln1_g, ln1_b)

    # --- kernel 2: fused FFN (both sub-blocks) + residual + LN2 --------------
    TM = _ffn_row_tile(B * Tp, Tp)
    out = pl.pallas_call(
        _ffn_ln2_kernel,
        out_shape=jax.ShapeDtypeStruct((B * Tp, C), x.dtype),
        grid=((B * Tp) // TM,),
        in_specs=[
            pl.BlockSpec((TM, C), lambda i: (i, 0)),
            pl.BlockSpec((C, hid), lambda i: (0, 0)),
            pl.BlockSpec((1, hid), lambda i: (0, 0)),
            pl.BlockSpec((hid, C), lambda i: (0, 0)),
            pl.BlockSpec((1, C), lambda i: (0, 0)),
            pl.BlockSpec((C, hid), lambda i: (0, 0)),
            pl.BlockSpec((1, hid), lambda i: (0, 0)),
            pl.BlockSpec((hid, C), lambda i: (0, 0)),
            pl.BlockSpec((1, C), lambda i: (0, 0)),
            pl.BlockSpec((1, C), lambda i: (0, 0)),
            pl.BlockSpec((1, C), lambda i: (0, 0)),
        ],
        out_specs=pl.BlockSpec((TM, C), lambda i: (i, 0)),
        compiler_params=cparams,
    )(h1, w1a_b, b1a_r, w2a_b, b2a_r, w1b_b, b1b_r, w2b_b, b2b_r, ln2_g, ln2_b)

    return out.reshape(B, Tp, C)[:, :T, :]


# ----------------------------------------------------------------------------
# Pure-JAX f32 reference (mirrors the PyTorch module exactly) for validation.
# ----------------------------------------------------------------------------
def _layernorm_ref(x, g, b, eps=LN_EPS):
    mean = jnp.mean(x, axis=-1, keepdims=True)
    var = jnp.mean(jnp.square(x - mean), axis=-1, keepdims=True)
    return (x - mean) * jax.lax.rsqrt(var + eps) * g + b


def block_forward_ref(x, params):
    B, T, C = x.shape
    H, _, D = params["wq"].shape
    idx = jnp.arange(T)[None, :] - jnp.arange(T)[:, None]
    idx = jnp.clip(idx, -(BLOCK_SIZE - 1), BLOCK_SIZE - 1) + BLOCK_SIZE - 1
    mask = jnp.tril(jnp.ones((T, T), dtype=bool))
    heads = []
    for h in range(H):
        q = x @ params["wq"][h]
        k = x @ params["wk"][h]
        v = x @ params["wv"][h]
        wei = q @ jnp.swapaxes(k, -1, -2) * (D ** -0.5)
        rel = params["rel_pos_emb"][h][idx]                  # (T, T, D)
        wei = wei + jnp.einsum("btd,tsd->bts", q, rel)
        wei = jnp.where(mask, wei, -jnp.inf)
        p = jax.nn.softmax(wei, axis=-1)
        heads.append(p @ v)
    sa = jnp.concatenate(heads, axis=-1) @ params["proj_w"] + params["proj_b"]
    h1 = _layernorm_ref(x + sa, params["ln1_g"], params["ln1_b"])
    f = h1
    for (w1, b1, w2, b2) in params["ffn"]:
        f = jax.nn.relu(f @ w1 + b1) @ w2 + b2
    return _layernorm_ref(h1 + f, params["ln2_g"], params["ln2_b"])


if __name__ == "__main__":
    B, T, n_embd, n_head = 2, 8, 64, 4      # small demo shapes; T <= block_size
    key = jax.random.PRNGKey(0)
    kx, kp = jax.random.split(key)
    x = jax.random.normal(kx, (B, T, n_embd), jnp.float32)
    params = init_params(kp, n_embd, n_head)

    out = jax.jit(block_forward)(x, params)
    out = jax.block_until_ready(out)

    assert out.shape == (B, T, n_embd), out.shape
    assert bool(jnp.all(jnp.isfinite(out)))

    # Validate against the f32 reference (bf16 MXU operands + approx softmax
    # reciprocal => loose tolerance).
    ref = block_forward_ref(x, params)
    max_err = float(jnp.max(jnp.abs(out - ref)))
    assert max_err < 5e-2, f"mismatch vs reference: {max_err}"

    print("KERNEL_OK")
</pallas_src>

<mosaic_0001>
module attributes {stable_mosaic.version = 11 : i64} {
  func.func @_ffn_ln2_kernel(%arg0: i32, %arg1: memref<16x64xf32, #tpu.memory_space<vmem>>, %arg2: memref<64x256xbf16, #tpu.memory_space<vmem>>, %arg3: memref<1x256xf32, #tpu.memory_space<vmem>>, %arg4: memref<256x64xbf16, #tpu.memory_space<vmem>>, %arg5: memref<1x64xf32, #tpu.memory_space<vmem>>, %arg6: memref<64x256xbf16, #tpu.memory_space<vmem>>, %arg7: memref<1x256xf32, #tpu.memory_space<vmem>>, %arg8: memref<256x64xbf16, #tpu.memory_space<vmem>>, %arg9: memref<1x64xf32, #tpu.memory_space<vmem>>, %arg10: memref<1x64xf32, #tpu.memory_space<vmem>>, %arg11: memref<1x64xf32, #tpu.memory_space<vmem>>, %arg12: memref<16x64xf32, #tpu.memory_space<vmem>>) attributes {dimension_semantics = [#tpu.dimension_semantics<parallel>], iteration_bounds = array<i64: 1>, scalar_prefetch = 0 : i64, scratch_operands = 0 : i64, tpu.core_type = #tpu.core_type<tc>, window_params = [{transform_indices = @transform_0, window_bounds = array<i64: 16, 64>}, {pipeline_mode = #tpu.pipeline_mode<synchronous>, transform_indices = @transform_1, window_bounds = array<i64: 64, 256>}, {pipeline_mode = #tpu.pipeline_mode<synchronous>, transform_indices = @transform_2, window_bounds = array<i64: 1, 256>}, {pipeline_mode = #tpu.pipeline_mode<synchronous>, transform_indices = @transform_3, window_bounds = array<i64: 256, 64>}, {pipeline_mode = #tpu.pipeline_mode<synchronous>, transform_indices = @transform_4, window_bounds = array<i64: 1, 64>}, {pipeline_mode = #tpu.pipeline_mode<synchronous>, transform_indices = @transform_5, window_bounds = array<i64: 64, 256>}, {pipeline_mode = #tpu.pipeline_mode<synchronous>, transform_indices = @transform_6, window_bounds = array<i64: 1, 256>}, {pipeline_mode = #tpu.pipeline_mode<synchronous>, transform_indices = @transform_7, window_bounds = array<i64: 256, 64>}, {pipeline_mode = #tpu.pipeline_mode<synchronous>, transform_indices = @transform_8, window_bounds = array<i64: 1, 64>}, {pipeline_mode = #tpu.pipeline_mode<synchronous>, transform_indices = @transform_9, window_bounds = array<i64: 1, 64>}, {pipeline_mode = #tpu.pipeline_mode<synchronous>, transform_indices = @transform_10, window_bounds = array<i64: 1, 64>}, {transform_indices = @transform_11, window_bounds = array<i64: 16, 64>}]} {
    %c0 = arith.constant 0 : index
    %c0_0 = arith.constant 0 : index
    %0 = vector.load %arg1[%c0, %c0_0] : memref<16x64xf32, #tpu.memory_space<vmem>>, vector<16x64xf32>
    %1 = arith.truncf %0 : vector<16x64xf32> to vector<16x64xbf16>
    %c0_1 = arith.constant 0 : index
    %c0_2 = arith.constant 0 : index
    %2 = vector.load %arg2[%c0_1, %c0_2] : memref<64x256xbf16, #tpu.memory_space<vmem>>, vector<64x256xbf16>
    %cst = arith.constant dense<0.000000e+00> : vector<16x256xf32>
    %3 = tpu.matmul %1, %2, %cst {dimension_numbers = #tpu.dot_dimension_numbers<[1], [0], [0], [1], [0, 0, 1, 1], [], []>} : vector<16x64xbf16>, vector<64x256xbf16>, vector<16x256xf32> -> vector<16x256xf32>
    %c0_3 = arith.constant 0 : index
    %c0_4 = arith.constant 0 : index
    %4 = vector.load %arg3[%c0_3, %c0_4] : memref<1x256xf32, #tpu.memory_space<vmem>>, vector<1x256xf32>
    %5 = vector.broadcast %4 : vector<1x256xf32> to vector<16x256xf32>
    %6 = arith.addf %3, %5 : vector<16x256xf32>
    %cst_5 = arith.constant 0.000000e+00 : f32
    %7 = vector.broadcast %cst_5 : f32 to vector<16x256xf32>
    %8 = arith.maximumf %6, %7 : vector<16x256xf32>
    %9 = arith.truncf %8 : vector<16x256xf32> to vector<16x256xbf16>
    %c0_6 = arith.constant 0 : index
    %c0_7 = arith.constant 0 : index
    %10 = vector.load %arg4[%c0_6, %c0_7] : memref<256x64xbf16, #tpu.memory_space<vmem>>, vector<256x64xbf16>
    %cst_8 = arith.constant dense<0.000000e+00> : vector<16x64xf32>
    %11 = tpu.matmul %9, %10, %cst_8 {dimension_numbers = #tpu.dot_dimension_numbers<[1], [0], [0], [1], [0, 0, 1, 1], [], []>} : vector<16x256xbf16>, vector<256x64xbf16>, vector<16x64xf32> -> vector<16x64xf32>
    %c0_9 = arith.constant 0 : index
    %c0_10 = arith.constant 0 : index
    %12 = vector.load %arg5[%c0_9, %c0_10] : memref<1x64xf32, #tpu.memory_space<vmem>>, vector<1x64xf32>
    %13 = vector.broadcast %12 : vector<1x64xf32> to vector<16x64xf32>
    %14 = arith.addf %11, %13 : vector<16x64xf32>
    %15 = arith.truncf %14 : vector<16x64xf32> to vector<16x64xbf16>
    %c0_11 = arith.constant 0 : index
    %c0_12 = arith.constant 0 : index
    %16 = vector.load %arg6[%c0_11, %c0_12] : memref<64x256xbf16, #tpu.memory_space<vmem>>, vector<64x256xbf16>
    %cst_13 = arith.constant dense<0.000000e+00> : vector<16x256xf32>
    %17 = tpu.matmul %15, %16, %cst_13 {dimension_numbers = #tpu.dot_dimension_numbers<[1], [0], [0], [1], [0, 0, 1, 1], [], []>} : vector<16x64xbf16>, vector<64x256xbf16>, vector<16x256xf32> -> vector<16x256xf32>
    %c0_14 = arith.constant 0 : index
    %c0_15 = arith.constant 0 : index
    %18 = vector.load %arg7[%c0_14, %c0_15] : memref<1x256xf32, #tpu.memory_space<vmem>>, vector<1x256xf32>
    %19 = vector.broadcast %18 : vector<1x256xf32> to vector<16x256xf32>
    %20 = arith.addf %17, %19 : vector<16x256xf32>
    %cst_16 = arith.constant 0.000000e+00 : f32
    %21 = vector.broadcast %cst_16 : f32 to vector<16x256xf32>
    %22 = arith.maximumf %20, %21 : vector<16x256xf32>
    %23 = arith.truncf %22 : vector<16x256xf32> to vector<16x256xbf16>
    %c0_17 = arith.constant 0 : index
    %c0_18 = arith.constant 0 : index
    %24 = vector.load %arg8[%c0_17, %c0_18] : memref<256x64xbf16, #tpu.memory_space<vmem>>, vector<256x64xbf16>
    %cst_19 = arith.constant dense<0.000000e+00> : vector<16x64xf32>
    %25 = tpu.matmul %23, %24, %cst_19 {dimension_numbers = #tpu.dot_dimension_numbers<[1], [0], [0], [1], [0, 0, 1, 1], [], []>} : vector<16x256xbf16>, vector<256x64xbf16>, vector<16x64xf32> -> vector<16x64xf32>
    %c0_20 = arith.constant 0 : index
    %c0_21 = arith.constant 0 : index
    %26 = vector.load %arg9[%c0_20, %c0_21] : memref<1x64xf32, #tpu.memory_space<vmem>>, vector<1x64xf32>
    %27 = vector.broadcast %26 : vector<1x64xf32> to vector<16x64xf32>
    %28 = arith.addf %25, %27 : vector<16x64xf32>
    %29 = arith.addf %0, %28 : vector<16x64xf32>
    %cst_22 = arith.constant dense<0.000000e+00> : vector<16xf32>
    %30 = vector.multi_reduction <add>, %29, %cst_22 [1] : vector<16x64xf32> to vector<16xf32>
    %31 = vector.shape_cast %30 : vector<16xf32> to vector<16x1xf32>
    %cst_23 = arith.constant 6.400000e+01 : f32
    %32 = vector.broadcast %cst_23 : f32 to vector<16x1xf32>
    %33 = arith.divf %31, %32 : vector<16x1xf32>
    %34 = vector.broadcast %33 : vector<16x1xf32> to vector<16x64xf32>
    %35 = arith.subf %29, %34 : vector<16x64xf32>
    %36 = arith.mulf %35, %35 : vector<16x64xf32>
    %cst_24 = arith.constant dense<0.000000e+00> : vector<16xf32>
    %37 = vector.multi_reduction <add>, %36, %cst_24 [1] : vector<16x64xf32> to vector<16xf32>
    %38 = vector.shape_cast %37 : vector<16xf32> to vector<16x1xf32>
    %cst_25 = arith.constant 6.400000e+01 : f32
    %39 = vector.broadcast %cst_25 : f32 to vector<16x1xf32>
    %40 = arith.divf %38, %39 : vector<16x1xf32>
    %41 = vector.broadcast %33 : vector<16x1xf32> to vector<16x64xf32>
    %42 = arith.subf %29, %41 : vector<16x64xf32>
    %cst_26 = arith.constant 9.99999974E-6 : f32
    %43 = vector.broadcast %cst_26 : f32 to vector<16x1xf32>
    %44 = arith.addf %40, %43 : vector<16x1xf32>
    %45 = math.rsqrt %44 : vector<16x1xf32>
    %46 = vector.broadcast %45 : vector<16x1xf32> to vector<16x64xf32>
    %47 = arith.mulf %42, %46 : vector<16x64xf32>
    %c0_27 = arith.constant 0 : index
    %c0_28 = arith.constant 0 : index
    %48 = vector.load %arg10[%c0_27, %c0_28] : memref<1x64xf32, #tpu.memory_space<vmem>>, vector<1x64xf32>
    %49 = vector.broadcast %48 : vector<1x64xf32> to vector<16x64xf32>
    %50 = arith.mulf %47, %49 : vector<16x64xf32>
    %c0_29 = arith.constant 0 : index
    %c0_30 = arith.constant 0 : index
    %51 = vector.load %arg11[%c0_29, %c0_30] : memref<1x64xf32, #tpu.memory_space<vmem>>, vector<1x64xf32>
    %52 = vector.broadcast %51 : vector<1x64xf32> to vector<16x64xf32>
    %53 = arith.addf %50, %52 : vector<16x64xf32>
    %c0_31 = arith.constant 0 : index
    %c0_32 = arith.constant 0 : index
    %54 = vector.load %arg12[%c0_31, %c0_32] : memref<16x64xf32, #tpu.memory_space<vmem>>, vector<16x64xf32>
    tpu.vector_store %arg12[%c0_31, %c0_32], %53 {strides = array<i32>} : memref<16x64xf32, #tpu.memory_space<vmem>>, vector<16x64xf32>,
    return
  }
  func.func @transform_0(%arg0: i32) -> (i32, i32) {
    %c0_i32 = arith.constant 0 : i32
    %c0_i32_0 = arith.constant 0 : i32
    return %arg0, %c0_i32 : i32, i32
  }
  func.func @transform_1(%arg0: i32) -> (i32, i32) {
    %c0_i32 = arith.constant 0 : i32
    %c0_i32_0 = arith.constant 0 : i32
    %c0_i32_1 = arith.constant 0 : i32
    return %c0_i32, %c0_i32_0 : i32, i32
  }
  func.func @transform_2(%arg0: i32) -> (i32, i32) {
    %c0_i32 = arith.constant 0 : i32
    %c0_i32_0 = arith.constant 0 : i32
    %c0_i32_1 = arith.constant 0 : i32
    return %c0_i32, %c0_i32_0 : i32, i32
  }
  func.func @transform_3(%arg0: i32) -> (i32, i32) {
    %c0_i32 = arith.constant 0 : i32
    %c0_i32_0 = arith.constant 0 : i32
    %c0_i32_1 = arith.constant 0 : i32
    return %c0_i32, %c0_i32_0 : i32, i32
  }
  func.func @transform_4(%arg0: i32) -> (i32, i32) {
    %c0_i32 = arith.constant 0 : i32
    %c0_i32_0 = arith.constant 0 : i32
    %c0_i32_1 = arith.constant 0 : i32
    return %c0_i32, %c0_i32_0 : i32, i32
  }
  func.func @transform_5(%arg0: i32) -> (i32, i32) {
    %c0_i32 = arith.constant 0 : i32
    %c0_i32_0 = arith.constant 0 : i32
    %c0_i32_1 = arith.constant 0 : i32
    return %c0_i32, %c0_i32_0 : i32, i32
  }
  func.func @transform_6(%arg0: i32) -> (i32, i32) {
    %c0_i32 = arith.constant 0 : i32
    %c0_i32_0 = arith.constant 0 : i32
    %c0_i32_1 = arith.constant 0 : i32
    return %c0_i32, %c0_i32_0 : i32, i32
  }
  func.func @transform_7(%arg0: i32) -> (i32, i32) {
    %c0_i32 = arith.constant 0 : i32
    %c0_i32_0 = arith.constant 0 : i32
    %c0_i32_1 = arith.constant 0 : i32
    return %c0_i32, %c0_i32_0 : i32, i32
  }
  func.func @transform_8(%arg0: i32) -> (i32, i32) {
    %c0_i32 = arith.constant 0 : i32
    %c0_i32_0 = arith.constant 0 : i32
    %c0_i32_1 = arith.constant 0 : i32
    return %c0_i32, %c0_i32_0 : i32, i32
  }
  func.func @transform_9(%arg0: i32) -> (i32, i32) {
    %c0_i32 = arith.constant 0 : i32
    %c0_i32_0 = arith.constant 0 : i32
    %c0_i32_1 = arith.constant 0 : i32
    return %c0_i32, %c0_i32_0 : i32, i32
  }
  func.func @transform_10(%arg0: i32) -> (i32, i32) {
    %c0_i32 = arith.constant 0 : i32
    %c0_i32_0 = arith.constant 0 : i32
    %c0_i32_1 = arith.constant 0 : i32
    return %c0_i32, %c0_i32_0 : i32, i32
  }
  func.func @transform_11(%arg0: i32) -> (i32, i32) {
    %c0_i32 = arith.constant 0 : i32
    %c0_i32_0 = arith.constant 0 : i32
    return %arg0, %c0_i32 : i32, i32
  }
}

module attributes {stable_mosaic.version = 11 : i64} {
  func.func @_attn_ln1_kernel(%arg0: i32, %arg1: memref<8x64xf32, #tpu.memory_space<vmem>>, %arg2: memref<64x192xbf16, #tpu.memory_space<vmem>>, %arg3: memref<4x16x128xbf16, #tpu.memory_space<vmem>>, %arg4: memref<64x64xbf16, #tpu.memory_space<vmem>>, %arg5: memref<1x64xf32, #tpu.memory_space<vmem>>, %arg6: memref<1x64xf32, #tpu.memory_space<vmem>>, %arg7: memref<1x64xf32, #tpu.memory_space<vmem>>, %arg8: memref<8x64xf32, #tpu.memory_space<vmem>>, %arg9: memref<8x192xf32, #tpu.memory_space<vmem>>, %arg10: memref<8x128xf32, #tpu.memory_space<vmem>>, %arg11: memref<8x8xf32, #tpu.memory_space<vmem>>, %arg12: memref<8x64xf32, #tpu.memory_space<vmem>>) attributes {dimension_semantics = [#tpu.dimension_semantics<parallel>], iteration_bounds = array<i64: 2>, scalar_prefetch = 0 : i64, scratch_operands = 4 : i64, tpu.core_type = #tpu.core_type<tc>, window_params = [{transform_indices = @transform_0, window_bounds = array<i64: 8, 64>}, {pipeline_mode = #tpu.pipeline_mode<synchronous>, transform_indices = @transform_1, window_bounds = array<i64: 64, 192>}, {pipeline_mode = #tpu.pipeline_mode<synchronous>, transform_indices = @transform_2, window_bounds = array<i64: 4, 16, 128>}, {pipeline_mode = #tpu.pipeline_mode<synchronous>, transform_indices = @transform_3, window_bounds = array<i64: 64, 64>}, {pipeline_mode = #tpu.pipeline_mode<synchronous>, transform_indices = @transform_4, window_bounds = array<i64: 1, 64>}, {pipeline_mode = #tpu.pipeline_mode<synchronous>, transform_indices = @transform_5, window_bounds = array<i64: 1, 64>}, {pipeline_mode = #tpu.pipeline_mode<synchronous>, transform_indices = @transform_6, window_bounds = array<i64: 1, 64>}, {transform_indices = @transform_7, window_bounds = array<i64: 8, 64>}]} {
    %c0 = arith.constant 0 : index
    %c0_0 = arith.constant 0 : index
    %0 = vector.load %arg1[%c0, %c0_0] : memref<8x64xf32, #tpu.memory_space<vmem>>, vector<8x64xf32>
    %1 = arith.truncf %0 : vector<8x64xf32> to vector<8x64xbf16>
    %c0_1 = arith.constant 0 : index
    %c0_2 = arith.constant 0 : index
    %2 = vector.load %arg2[%c0_1, %c0_2] : memref<64x192xbf16, #tpu.memory_space<vmem>>, vector<64x192xbf16>
    %cst = arith.constant dense<0.000000e+00> : vector<8x192xf32>
    %3 = tpu.matmul %1, %2, %cst {dimension_numbers = #tpu.dot_dimension_numbers<[1], [0], [0], [1], [0, 0, 1, 1], [], []>} : vector<8x64xbf16>, vector<64x192xbf16>, vector<8x192xf32> -> vector<8x192xf32>
    %c0_3 = arith.constant 0 : index
    %c0_4 = arith.constant 0 : index
    %4 = vector.load %arg9[%c0_3, %c0_4] : memref<8x192xf32, #tpu.memory_space<vmem>>, vector<8x192xf32>
    tpu.vector_store %arg9[%c0_3, %c0_4], %3 {strides = array<i32>} : memref<8x192xf32, #tpu.memory_space<vmem>>, vector<8x192xf32>,
    %5 = tpu.iota {dimensions = array<i32: 0>} : vector<8x8xi32>
    %6 = tpu.iota {dimensions = array<i32: 1>} : vector<8x8xi32>
    %7 = arith.cmpi sle, %6, %5 : vector<8x8xi32>
    %c0_5 = arith.constant 0 : index
    %c0_6 = arith.constant 0 : index
    %8 = vector.load %arg9[%c0_5, %c0_6] : memref<8x192xf32, #tpu.memory_space<vmem>>, vector<8x16xf32>
    %c0_7 = arith.constant 0 : index
    %c64 = arith.constant 64 : index
    %9 = vector.load %arg9[%c0_7, %c64] : memref<8x192xf32, #tpu.memory_space<vmem>>, vector<8x16xf32>
    %c0_8 = arith.constant 0 : index
    %c128 = arith.constant 128 : index
    %10 = vector.load %arg9[%c0_8, %c128] : memref<8x192xf32, #tpu.memory_space<vmem>>, vector<8x16xf32>
    %11 = arith.truncf %8 : vector<8x16xf32> to vector<8x16xbf16>
    %12 = arith.truncf %9 : vector<8x16xf32> to vector<8x16xbf16>
    %13 = tpu.transpose %12, [1, 0] : vector<8x16xbf16> -> vector<16x8xbf16>
    %cst_9 = arith.constant dense<0.000000e+00> : vector<8x8xf32>
    %14 = tpu.matmul %11, %13, %cst_9 {dimension_numbers = #tpu.dot_dimension_numbers<[1], [0], [0], [1], [0, 0, 1, 1], [], []>} : vector<8x16xbf16>, vector<16x8xbf16>, vector<8x8xf32> -> vector<8x8xf32>
    %cst_10 = arith.constant 2.500000e-01 : f32
    %15 = vector.broadcast %cst_10 : f32 to vector<8x8xf32>
    %16 = arith.mulf %14, %15 : vector<8x8xf32>
    %c0_11 = arith.constant 0 : index
    %c0_12 = arith.constant 0 : index
    %c0_13 = arith.constant 0 : index
    %17 = vector.load %arg3[%c0_11, %c0_12, %c0_13] : memref<4x16x128xbf16, #tpu.memory_space<vmem>>, vector<1x16x128xbf16>
    %18 = vector.shape_cast %17 : vector<1x16x128xbf16> to vector<16x128xbf16>
    %cst_14 = arith.constant dense<0.000000e+00> : vector<8x128xf32>
    %19 = tpu.matmul %11, %18, %cst_14 {dimension_numbers = #tpu.dot_dimension_numbers<[1], [0], [0], [1], [0, 0, 1, 1], [], []>} : vector<8x16xbf16>, vector<16x128xbf16>, vector<8x128xf32> -> vector<8x128xf32>
    %c0_15 = arith.constant 0 : index
    %c0_16 = arith.constant 0 : index
    %20 = vector.load %arg10[%c0_15, %c0_16] : memref<8x128xf32, #tpu.memory_space<vmem>>, vector<8x128xf32>
    tpu.vector_store %arg10[%c0_15, %c0_16], %19 {strides = array<i32>} : memref<8x128xf32, #tpu.memory_space<vmem>>, vector<8x128xf32>,
    %c0_17 = arith.constant 0 : index
    %c49 = arith.constant 49 : index
    %21 = vector.load %arg10[%c0_17, %c49] : memref<8x128xf32, #tpu.memory_space<vmem>>, vector<1x8xf32>
    %c0_18 = arith.constant 0 : index
    %c0_19 = arith.constant 0 : index
    %22 = vector.load %arg11[%c0_18, %c0_19] : memref<8x8xf32, #tpu.memory_space<vmem>>, vector<1x8xf32>
    tpu.vector_store %arg11[%c0_18, %c0_19], %21 {strides = array<i32>} : memref<8x8xf32, #tpu.memory_space<vmem>>, vector<1x8xf32>,
    %c1 = arith.constant 1 : index
    %c48 = arith.constant 48 : index
    %23 = vector.load %arg10[%c1, %c48] : memref<8x128xf32, #tpu.memory_space<vmem>>, vector<1x8xf32>
    %c1_20 = arith.constant 1 : index
    %c0_21 = arith.constant 0 : index
    %24 = vector.load %arg11[%c1_20, %c0_21] : memref<8x8xf32, #tpu.memory_space<vmem>>, vector<1x8xf32>
    tpu.vector_store %arg11[%c1_20, %c0_21], %23 {strides = array<i32>} : memref<8x8xf32, #tpu.memory_space<vmem>>, vector<1x8xf32>,
    %c2 = arith.constant 2 : index
    %c47 = arith.constant 47 : index
    %25 = vector.load %arg10[%c2, %c47] : memref<8x128xf32, #tpu.memory_space<vmem>>, vector<1x8xf32>
    %c2_22 = arith.constant 2 : index
    %c0_23 = arith.constant 0 : index
    %26 = vector.load %arg11[%c2_22, %c0_23] : memref<8x8xf32, #tpu.memory_space<vmem>>, vector<1x8xf32>
    tpu.vector_store %arg11[%c2_22, %c0_23], %25 {strides = array<i32>} : memref<8x8xf32, #tpu.memory_space<vmem>>, vector<1x8xf32>,
    %c3 = arith.constant 3 : index
    %c46 = arith.constant 46 : index
    %27 = vector.load %arg10[%c3, %c46] : memref<8x128xf32, #tpu.memory_space<vmem>>, vector<1x8xf32>
    %c3_24 = arith.constant 3 : index
    %c0_25 = arith.constant 0 : index
    %28 = vector.load %arg11[%c3_24, %c0_25] : memref<8x8xf32, #tpu.memory_space<vmem>>, vector<1x8xf32>
    tpu.vector_store %arg11[%c3_24, %c0_25], %27 {strides = array<i32>} : memref<8x8xf32, #tpu.memory_space<vmem>>, vector<1x8xf32>,
    %c4 = arith.constant 4 : index
    %c45 = arith.constant 45 : index
    %29 = vector.load %arg10[%c4, %c45] : memref<8x128xf32, #tpu.memory_space<vmem>>, vector<1x8xf32>
    %c4_26 = arith.constant 4 : index
    %c0_27 = arith.constant 0 : index
    %30 = vector.load %arg11[%c4_26, %c0_27] : memref<8x8xf32, #tpu.memory_space<vmem>>, vector<1x8xf32>
    tpu.vector_store %arg11[%c4_26, %c0_27], %29 {strides = array<i32>} : memref<8x8xf32, #tpu.memory_space<vmem>>, vector<1x8xf32>,
    %c5 = arith.constant 5 : index
    %c44 = arith.constant 44 : index
    %31 = vector.load %arg10[%c5, %c44] : memref<8x128xf32, #tpu.memory_space<vmem>>, vector<1x8xf32>
    %c5_28 = arith.constant 5 : index
    %c0_29 = arith.constant 0 : index
    %32 = vector.load %arg11[%c5_28, %c0_29] : memref<8x8xf32, #tpu.memory_space<vmem>>, vector<1x8xf32>
    tpu.vector_store %arg11[%c5_28, %c0_29], %31 {strides = array<i32>} : memref<8x8xf32, #tpu.memory_space<vmem>>, vector<1x8xf32>,
    %c6 = arith.constant 6 : index
    %c43 = arith.constant 43 : index
    %33 = vector.load %arg10[%c6, %c43] : memref<8x128xf32, #tpu.memory_space<vmem>>, vector<1x8xf32>
    %c6_30 = arith.constant 6 : index
    %c0_31 = arith.constant 0 : index
    %34 = vector.load %arg11[%c6_30, %c0_31] : memref<8x8xf32, #tpu.memory_space<vmem>>, vector<1x8xf32>
    tpu.vector_store %arg11[%c6_30, %c0_31], %33 {strides = array<i32>} : memref<8x8xf32, #tpu.memory_space<vmem>>, vector<1x8xf32>,
    %c7 = arith.constant 7 : index
    %c42 = arith.constant 42 : index
    %35 = vector.load %arg10[%c7, %c42] : memref<8x128xf32, #tpu.memory_space<vmem>>, vector<1x8xf32>
    %c7_32 = arith.constant 7 : index
    %c0_33 = arith.constant 0 : index
    %36 = vector.load %arg11[%c7_32, %c0_33] : memref<8x8xf32, #tpu.memory_space<vmem>>, vector<1x8xf32>
    tpu.vector_store %arg11[%c7_32, %c0_33], %35 {strides = array<i32>} : memref<8x8xf32, #tpu.memory_space<vmem>>, vector<1x8xf32>,
    %c0_34 = arith.constant 0 : index
    %c0_35 = arith.constant 0 : index
    %37 = vector.load %arg11[%c0_34, %c0_35] : memref<8x8xf32, #tpu.memory_space<vmem>>, vector<8x8xf32>
    %38 = arith.addf %16, %37 : vector<8x8xf32>
    %cst_36 = arith.constant -1.000000e+30 : f32
    %39 = vector.broadcast %cst_36 : f32 to vector<8x8xf32>
    %40 = arith.select %7, %38, %39 : vector<8x8xi1>, vector<8x8xf32>
    %cst_37 = arith.constant dense<0xFF800000> : vector<8xf32>
    %41 = vector.multi_reduction <maximumf>, %40, %cst_37 [1] : vector<8x8xf32> to vector<8xf32>
    %42 = vector.shape_cast %41 : vector<8xf32> to vector<8x1xf32>
    %43 = vector.broadcast %42 : vector<8x1xf32> to vector<8x8xf32>
    %44 = arith.subf %40, %43 : vector<8x8xf32>
    %45 = math.exp %44 : vector<8x8xf32>
    %cst_38 = arith.constant dense<0.000000e+00> : vector<8xf32>
    %46 = vector.multi_reduction <add>, %45, %cst_38 [1] : vector<8x8xf32> to vector<8xf32>
    %47 = vector.shape_cast %46 : vector<8xf32> to vector<8x1xf32>
    %48 = tpu.reciprocal %47 {approx = true} : vector<8x1xf32> -> vector<8x1xf32>
    %49 = vector.broadcast %48 : vector<8x1xf32> to vector<8x8xf32>
    %50 = arith.mulf %45, %49 : vector<8x8xf32>
    %51 = arith.truncf %50 : vector<8x8xf32> to vector<8x8xbf16>
    %52 = arith.truncf %10 : vector<8x16xf32> to vector<8x16xbf16>
    %cst_39 = arith.constant dense<0.000000e+00> : vector<8x16xf32>
    %53 = tpu.matmul %51, %52, %cst_39 {dimension_numbers = #tpu.dot_dimension_numbers<[1], [0], [0], [1], [0, 0, 1, 1], [], []>} : vector<8x8xbf16>, vector<8x16xbf16>, vector<8x16xf32> -> vector<8x16xf32>
    %c0_40 = arith.constant 0 : index
    %c0_41 = arith.constant 0 : index
    %54 = vector.load %arg12[%c0_40, %c0_41] : memref<8x64xf32, #tpu.memory_space<vmem>>, vector<8x16xf32>
    tpu.vector_store %arg12[%c0_40, %c0_41], %53 {strides = array<i32>} : memref<8x64xf32, #tpu.memory_space<vmem>>, vector<8x16xf32>,
    %c0_42 = arith.constant 0 : index
    %c16 = arith.constant 16 : index
    %55 = vector.load %arg9[%c0_42, %c16] : memref<8x192xf32, #tpu.memory_space<vmem>>, vector<8x16xf32>
    %c0_43 = arith.constant 0 : index
    %c80 = arith.constant 80 : index
    %56 = vector.load %arg9[%c0_43, %c80] : memref<8x192xf32, #tpu.memory_space<vmem>>, vector<8x16xf32>
    %c0_44 = arith.constant 0 : index
    %c144 = arith.constant 144 : index
    %57 = vector.load %arg9[%c0_44, %c144] : memref<8x192xf32, #tpu.memory_space<vmem>>, vector<8x16xf32>
    %58 = arith.truncf %55 : vector<8x16xf32> to vector<8x16xbf16>
    %59 = arith.truncf %56 : vector<8x16xf32> to vector<8x16xbf16>
    %60 = tpu.transpose %59, [1, 0] : vector<8x16xbf16> -> vector<16x8xbf16>
    %cst_45 = arith.constant dense<0.000000e+00> : vector<8x8xf32>
    %61 = tpu.matmul %58, %60, %cst_45 {dimension_numbers = #tpu.dot_dimension_numbers<[1], [0], [0], [1], [0, 0, 1, 1], [], []>} : vector<8x16xbf16>, vector<16x8xbf16>, vector<8x8xf32> -> vector<8x8xf32>
    %cst_46 = arith.constant 2.500000e-01 : f32
    %62 = vector.broadcast %cst_46 : f32 to vector<8x8xf32>
    %63 = arith.mulf %61, %62 : vector<8x8xf32>
    %c1_47 = arith.constant 1 : index
    %c0_48 = arith.constant 0 : index
    %c0_49 = arith.constant 0 : index
    %64 = vector.load %arg3[%c1_47, %c0_48, %c0_49] : memref<4x16x128xbf16, #tpu.memory_space<vmem>>, vector<1x16x128xbf16>
    %65 = vector.shape_cast %64 : vector<1x16x128xbf16> to vector<16x128xbf16>
    %cst_50 = arith.constant dense<0.000000e+00> : vector<8x128xf32>
    %66 = tpu.matmul %58, %65, %cst_50 {dimension_numbers = #tpu.dot_dimension_numbers<[1], [0], [0], [1], [0, 0, 1, 1], [], []>} : vector<8x16xbf16>, vector<16x128xbf16>, vector<8x128xf32> -> vector<8x128xf32>
    %c0_51 = arith.constant 0 : index
    %c0_52 = arith.constant 0 : index
    %67 = vector.load %arg10[%c0_51, %c0_52] : memref<8x128xf32, #tpu.memory_space<vmem>>, vector<8x128xf32>
    tpu.vector_store %arg10[%c0_51, %c0_52], %66 {strides = array<i32>} : memref<8x128xf32, #tpu.memory_space<vmem>>, vector<8x128xf32>,
    %c0_53 = arith.constant 0 : index
    %c49_54 = arith.constant 49 : index
    %68 = vector.load %arg10[%c0_53, %c49_54] : memref<8x128xf32, #tpu.memory_space<vmem>>, vector<1x8xf32>
    %c0_55 = arith.constant 0 : index
    %c0_56 = arith.constant 0 : index
    %69 = vector.load %arg11[%c0_55, %c0_56] : memref<8x8xf32, #tpu.memory_space<vmem>>, vector<1x8xf32>
    tpu.vector_store %arg11[%c0_55, %c0_56], %68 {strides = array<i32>} : memref<8x8xf32, #tpu.memory_space<vmem>>, vector<1x8xf32>,
    %c1_57 = arith.constant 1 : index
    %c48_58 = arith.constant 48 : index
    %70 = vector.load %arg10[%c1_57, %c48_58] : memref<8x128xf32, #tpu.memory_space<vmem>>, vector<1x8xf32>
    %c1_59 = arith.constant 1 : index
    %c0_60 = arith.constant 0 : index
    %71 = vector.load %arg11[%c1_59, %c0_60] : memref<8x8xf32, #tpu.memory_space<vmem>>, vector<1x8xf32>
    tpu.vector_store %arg11[%c1_59, %c0_60], %70 {strides = array<i32>} : memref<8x8xf32, #tpu.memory_space<vmem>>, vector<1x8xf32>,
    %c2_61 = arith.constant 2 : index
    %c47_62 = arith.constant 47 : index
    %72 = vector.load %arg10[%c2_61, %c47_62] : memref<8x128xf32, #tpu.memory_space<vmem>>, vector<1x8xf32>
    %c2_63 = arith.constant 2 : index
    %c0_64 = arith.constant 0 : index
    %73 = vector.load %arg11[%c2_63, %c0_64] : memref<8x8xf32, #tpu.memory_space<vmem>>, vector<1x8xf32>
    tpu.vector_store %arg11[%c2_63, %c0_64], %72 {strides = array<i32>} : memref<8x8xf32, #tpu.memory_space<vmem>>, vector<1x8xf32>,
    %c3_65 = arith.constant 3 : index
    %c46_66 = arith.constant 46 : index
    %74 = vector.load %arg10[%c3_65, %c46_66] : memref<8x128xf32, #tpu.memory_space<vmem>>, vector<1x8xf32>
    %c3_67 = arith.constant 3 : index
    %c0_68 = arith.constant 0 : index
    %75 = vector.load %arg11[%c3_67, %c0_68] : memref<8x8xf32, #tpu.memory_space<vmem>>, vector<1x8xf32>
    tpu.vector_store %arg11[%c3_67, %c0_68], %74 {strides = array<i32>} : memref<8x8xf32, #tpu.memory_space<vmem>>, vector<1x8xf32>,
    %c4_69 = arith.constant 4 : index
    %c45_70 = arith.constant 45 : index
    %76 = vector.load %arg10[%c4_69, %c45_70] : memref<8x128xf32, #tpu.memory_space<vmem>>, vector<1x8xf32>
    %c4_71 = arith.constant 4 : index
    %c0_72 = arith.constant 0 : index
    %77 = vector.load %arg11[%c4_71, %c0_72] : memref<8x8xf32, #tpu.memory_space<vmem>>, vector<1x8xf32>
    tpu.vector_store %arg11[%c4_71, %c0_72], %76 {strides = array<i32>} : memref<8x8xf32, #tpu.memory_space<vmem>>, vector<1x8xf32>,
    %c5_73 = arith.constant 5 : index
    %c44_74 = arith.constant 44 : index
    %78 = vector.load %arg10[%c5_73, %c44_74] : memref<8x128xf32, #tpu.memory_space<vmem>>, vector<1x8xf32>
    %c5_75 = arith.constant 5 : index
    %c0_76 = arith.constant 0 : index
    %79 = vector.load %arg11[%c5_75, %c0_76] : memref<8x8xf32, #tpu.memory_space<vmem>>, vector<1x8xf32>
    tpu.vector_store %arg11[%c5_75, %c0_76], %78 {strides = array<i32>} : memref<8x8xf32, #tpu.memory_space<vmem>>, vector<1x8xf32>,
    %c6_77 = arith.constant 6 : index
    %c43_78 = arith.constant 43 : index
    %80 = vector.load %arg10[%c6_77, %c43_78] : memref<8x128xf32, #tpu.memory_space<vmem>>, vector<1x8xf32>
    %c6_79 = arith.constant 6 : index
    %c0_80 = arith.constant 0 : index
    %81 = vector.load %arg11[%c6_79, %c0_80] : memref<8x8xf32, #tpu.memory_space<vmem>>, vector<1x8xf32>
    tpu.vector_store %arg11[%c6_79, %c0_80], %80 {strides = array<i32>} : memref<8x8xf32, #tpu.memory_space<vmem>>, vector<1x8xf32>,
    %c7_81 = arith.constant 7 : index
    %c42_82 = arith.constant 42 : index
    %82 = vector.load %arg10[%c7_81, %c42_82] : memref<8x128xf32, #tpu.memory_space<vmem>>, vector<1x8xf32>
    %c7_83 = arith.constant 7 : index
    %c0_84 = arith.constant 0 : index
    %83 = vector.load %arg11[%c7_83, %c0_84] : memref<8x8xf32, #tpu.memory_space<vmem>>, vector<1x8xf32>
    tpu.vector_store %arg11[%c7_83, %c0_84], %82 {strides = array<i32>} : memref<8x8xf32, #tpu.memory_space<vmem>>, vector<1x8xf32>,
    %c0_85 = arith.constant 0 : index
    %c0_86 = arith.constant 0 : index
    %84 = vector.load %arg11[%c0_85, %c0_86] : memref<8x8xf32, #tpu.memory_space<vmem>>, vector<8x8xf32>
    %85 = arith.addf %63, %84 : vector<8x8xf32>
    %cst_87 = arith.constant -1.000000e+30 : f32
    %86 = vector.broadcast %cst_87 : f32 to vector<8x8xf32>
    %87 = arith.select %7, %85, %86 : vector<8x8xi1>, vector<8x8xf32>
    %cst_88 = arith.constant dense<0xFF800000> : vector<8xf32>
    %88 = vector.multi_reduction <maximumf>, %87, %cst_88 [1] : vector<8x8xf32> to vector<8xf32>
    %89 = vector.shape_cast %88 : vector<8xf32> to vector<8x1xf32>
    %90 = vector.broadcast %89 : vector<8x1xf32> to vector<8x8xf32>
    %91 = arith.subf %87, %90 : vector<8x8xf32>
    %92 = math.exp %91 : vector<8x8xf32>
    %cst_89 = arith.constant dense<0.000000e+00> : vector<8xf32>
    %93 = vector.multi_reduction <add>, %92, %cst_89 [1] : vector<8x8xf32> to vector<8xf32>
    %94 = vector.shape_cast %93 : vector<8xf32> to vector<8x1xf32>
    %95 = tpu.reciprocal %94 {approx = true} : vector<8x1xf32> -> vector<8x1xf32>
    %96 = vector.broadcast %95 : vector<8x1xf32> to vector<8x8xf32>
    %97 = arith.mulf %92, %96 : vector<8x8xf32>
    %98 = arith.truncf %97 : vector<8x8xf32> to vector<8x8xbf16>
    %99 = arith.truncf %57 : vector<8x16xf32> to vector<8x16xbf16>
    %cst_90 = arith.constant dense<0.000000e+00> : vector<8x16xf32>
    %100 = tpu.matmul %98, %99, %cst_90 {dimension_numbers = #tpu.dot_dimension_numbers<[1], [0], [0], [1], [0, 0, 1, 1], [], []>} : vector<8x8xbf16>, vector<8x16xbf16>, vector<8x16xf32> -> vector<8x16xf32>
    %c0_91 = arith.constant 0 : index
    %c16_92 = arith.constant 16 : index
    %101 = vector.load %arg12[%c0_91, %c16_92] : memref<8x64xf32, #tpu.memory_space<vmem>>, vector<8x16xf32>
    tpu.vector_store %arg12[%c0_91, %c16_92], %100 {strides = array<i32>} : memref<8x64xf32, #tpu.memory_space<vmem>>, vector<8x16xf32>,
    %c0_93 = arith.constant 0 : index
    %c32 = arith.constant 32 : index
    %102 = vector.load %arg9[%c0_93, %c32] : memref<8x192xf32, #tpu.memory_space<vmem>>, vector<8x16xf32>
    %c0_94 = arith.constant 0 : index
    %c96 = arith.constant 96 : index
    %103 = vector.load %arg9[%c0_94, %c96] : memref<8x192xf32, #tpu.memory_space<vmem>>, vector<8x16xf32>
    %c0_95 = arith.constant 0 : index
    %c160 = arith.constant 160 : index
    %104 = vector.load %arg9[%c0_95, %c160] : memref<8x192xf32, #tpu.memory_space<vmem>>, vector<8x16xf32>
    %105 = arith.truncf %102 : vector<8x16xf32> to vector<8x16xbf16>
    %106 = arith.truncf %103 : vector<8x16xf32> to vector<8x16xbf16>
    %107 = tpu.transpose %106, [1, 0] : vector<8x16xbf16> -> vector<16x8xbf16>
    %cst_96 = arith.constant dense<0.000000e+00> : vector<8x8xf32>
    %108 = tpu.matmul %105, %107, %cst_96 {dimension_numbers = #tpu.dot_dimension_numbers<[1], [0], [0], [1], [0, 0, 1, 1], [], []>} : vector<8x16xbf16>, vector<16x8xbf16>, vector<8x8xf32> -> vector<8x8xf32>
    %cst_97 = arith.constant 2.500000e-01 : f32
    %109 = vector.broadcast %cst_97 : f32 to vector<8x8xf32>
    %110 = arith.mulf %108, %109 : vector<8x8xf32>
    %c2_98 = arith.constant 2 : index
    %c0_99 = arith.constant 0 : index
    %c0_100 = arith.constant 0 : index
    %111 = vector.load %arg3[%c2_98, %c0_99, %c0_100] : memref<4x16x128xbf16, #tpu.memory_space<vmem>>, vector<1x16x128xbf16>
    %112 = vector.shape_cast %111 : vector<1x16x128xbf16> to vector<16x128xbf16>
    %cst_101 = arith.constant dense<0.000000e+00> : vector<8x128xf32>
    %113 = tpu.matmul %105, %112, %cst_101 {dimension_numbers = #tpu.dot_dimension_numbers<[1], [0], [0], [1], [0, 0, 1, 1], [], []>} : vector<8x16xbf16>, vector<16x128xbf16>, vector<8x128xf32> -> vector<8x128xf32>
    %c0_102 = arith.constant 0 : index
    %c0_103 = arith.constant 0 : index
    %114 = vector.load %arg10[%c0_102, %c0_103] : memref<8x128xf32, #tpu.memory_space<vmem>>, vector<8x128xf32>
    tpu.vector_store %arg10[%c0_102, %c0_103], %113 {strides = array<i32>} : memref<8x128xf32, #tpu.memory_space<vmem>>, vector<8x128xf32>,
    %c0_104 = arith.constant 0 : index
    %c49_105 = arith.constant 49 : index
    %115 = vector.load %arg10[%c0_104, %c49_105] : memref<8x128xf32, #tpu.memory_space<vmem>>, vector<1x8xf32>
    %c0_106 = arith.constant 0 : index
    %c0_107 = arith.constant 0 : index
    %116 = vector.load %arg11[%c0_106, %c0_107] : memref<8x8xf32, #tpu.memory_space<vmem>>, vector<1x8xf32>
    tpu.vector_store %arg11[%c0_106, %c0_107], %115 {strides = array<i32>} : memref<8x8xf32, #tpu.memory_space<vmem>>, vector<1x8xf32>,
    %c1_108 = arith.constant 1 : index
    %c48_109 = arith.constant 48 : index
    %117 = vector.load %arg10[%c1_108, %c48_109] : memref<8x128xf32, #tpu.memory_space<vmem>>, vector<1x8xf32>
    %c1_110 = arith.constant 1 : index
    %c0_111 = arith.constant 0 : index
    %118 = vector.load %arg11[%c1_110, %c0_111] : memref<8x8xf32, #tpu.memory_space<vmem>>, vector<1x8xf32>
    tpu.vector_store %arg11[%c1_110, %c0_111], %117 {strides = array<i32>} : memref<8x8xf32, #tpu.memory_space<vmem>>, vector<1x8xf32>,
    %c2_112 = arith.constant 2 : index
    %c47_113 = arith.constant 47 : index
    %119 = vector.load %arg10[%c2_112, %c47_113] : memref<8x128xf32, #tpu.memory_space<vmem>>, vector<1x8xf32>
    %c2_114 = arith.constant 2 : index
    %c0_115 = arith.constant 0 : index
    %120 = vector.load %arg11[%c2_114, %c0_115] : memref<8x8xf32, #tpu.memory_space<vmem>>, vector<1x8xf32>
    tpu.vector_store %arg11[%c2_114, %c0_115], %119 {strides = array<i32>} : memref<8x8xf32, #tpu.memory_space<vmem>>, vector<1x8xf32>,
    %c3_116 = arith.constant 3 : index
    %c46_117 = arith.constant 46 : index
    %121 = vector.load %arg10[%c3_116, %c46_117] : memref<8x128xf32, #tpu.memory_space<vmem>>, vector<1x8xf32>
    %c3_118 = arith.constant 3 : index
    %c0_119 = arith.constant 0 : index
    %122 = vector.load %arg11[%c3_118, %c0_119] : memref<8x8xf32, #tpu.memory_space<vmem>>, vector<1x8xf32>
    tpu.vector_store %arg11[%c3_118, %c0_119], %121 {strides = array<i32>} : memref<8x8xf32, #tpu.memory_space<vmem>>, vector<1x8xf32>,
    %c4_120 = arith.constant 4 : index
    %c45_121 = arith.constant 45 : index
    %123 = vector.load %arg10[%c4_120, %c45_121] : memref<8x128xf32, #tpu.memory_space<vmem>>, vector<1x8xf32>
    %c4_122 = arith.constant 4 : index
    %c0_123 = arith.constant 0 : index
    %124 = vector.load %arg11[%c4_122, %c0_123] : memref<8x8xf32, #tpu.memory_space<vmem>>, vector<1x8xf32>
    tpu.vector_store %arg11[%c4_122, %c0_123], %123 {strides = array<i32>} : memref<8x8xf32, #tpu.memory_space<vmem>>, vector<1x8xf32>,
    %c5_124 = arith.constant 5 : index
    %c44_125 = arith.constant 44 : index
    %125 = vector.load %arg10[%c5_124, %c44_125] : memref<8x128xf32, #tpu.memory_space<vmem>>, vector<1x8xf32>
    %c5_126 = arith.constant 5 : index
    %c0_127 = arith.constant 0 : index
    %126 = vector.load %arg11[%c5_126, %c0_127] : memref<8x8xf32, #tpu.memory_space<vmem>>, vector<1x8xf32>
    tpu.vector_store %arg11[%c5_126, %c0_127], %125 {strides = array<i32>} : memref<8x8xf32, #tpu.memory_space<vmem>>, vector<1x8xf32>,
    %c6_128 = arith.constant 6 : index
    %c43_129 = arith.constant 43 : index
    %127 = vector.load %arg10[%c6_128, %c43_129] : memref<8x128xf32, #tpu.memory_space<vmem>>, vector<1x8xf32>
    %c6_130 = arith.constant 6 : index
    %c0_131 = arith.constant 0 : index
    %128 = vector.load %arg11[%c6_130, %c0_131] : memref<8x8xf32, #tpu.memory_space<vmem>>, vector<1x8xf32>
    tpu.vector_store %arg11[%c6_130, %c0_131], %127 {strides = array<i32>} : memref<8x8xf32, #tpu.memory_space<vmem>>, vector<1x8xf32>,
    %c7_132 = arith.constant 7 : index
    %c42_133 = arith.constant 42 : index
    %129 = vector.load %arg10[%c7_132, %c42_133] : memref<8x128xf32, #tpu.memory_space<vmem>>, vector<1x8xf32>
    %c7_134 = arith.constant 7 : index
    %c0_135 = arith.constant 0 : index
    %130 = vector.load %arg11[%c7_134, %c0_135] : memref<8x8xf32, #tpu.memory_space<vmem>>, vector<1x8xf32>
    tpu.vector_store %arg11[%c7_134, %c0_135], %129 {strides = array<i32>} : memref<8x8xf32, #tpu.memory_space<vmem>>, vector<1x8xf32>,
    %c0_136 = arith.constant 0 : index
    %c0_137 = arith.constant 0 : index
    %131 = vector.load %arg11[%c0_136, %c0_137] : memref<8x8xf32, #tpu.memory_space<vmem>>, vector<8x8xf32>
    %132 = arith.addf %110, %131 : vector<8x8xf32>
    %cst_138 = arith.constant -1.000000e+30 : f32
    %133 = vector.broadcast %cst_138 : f32 to vector<8x8xf32>
    %134 = arith.select %7, %132, %133 : vector<8x8xi1>, vector<8x8xf32>
    %cst_139 = arith.constant dense<0xFF800000> : vector<8xf32>
    %135 = vector.multi_reduction <maximumf>, %134, %cst_139 [1] : vector<8x8xf32> to vector<8xf32>
    %136 = vector.shape_cast %135 : vector<8xf32> to vector<8x1xf32>
    %137 = vector.broadcast %136 : vector<8x1xf32> to vector<8x8xf32>
    %138 = arith.subf %134, %137 : vector<8x8xf32>
    %139 = math.exp %138 : vector<8x8xf32>
    %cst_140 = arith.constant dense<0.000000e+00> : vector<8xf32>
    %140 = vector.multi_reduction <add>, %139, %cst_140 [1] : vector<8x8xf32> to vector<8xf32>
    %141 = vector.shape_cast %140 : vector<8xf32> to vector<8x1xf32>
    %142 = tpu.reciprocal %141 {approx = true} : vector<8x1xf32> -> vector<8x1xf32>
    %143 = vector.broadcast %142 : vector<8x1xf32> to vector<8x8xf32>
    %144 = arith.mulf %139, %143 : vector<8x8xf32>
    %145 = arith.truncf %144 : vector<8x8xf32> to vector<8x8xbf16>
    %146 = arith.truncf %104 : vector<8x16xf32> to vector<8x16xbf16>
    %cst_141 = arith.constant dense<0.000000e+00> : vector<8x16xf32>
    %147 = tpu.matmul %145, %146, %cst_141 {dimension_numbers = #tpu.dot_dimension_numbers<[1], [0], [0], [1], [0, 0, 1, 1], [], []>} : vector<8x8xbf16>, vector<8x16xbf16>, vector<8x16xf32> -> vector<8x16xf32>
    %c0_142 = arith.constant 0 : index
    %c32_143 = arith.constant 32 : index
    %148 = vector.load %arg12[%c0_142, %c32_143] : memref<8x64xf32, #tpu.memory_space<vmem>>, vector<8x16xf32>
    tpu.vector_store %arg12[%c0_142, %c32_143], %147 {strides = array<i32>} : memref<8x64xf32, #tpu.memory_space<vmem>>, vector<8x16xf32>,
    %c0_144 = arith.constant 0 : index
    %c48_145 = arith.constant 48 : index
    %149 = vector.load %arg9[%c0_144, %c48_145] : memref<8x192xf32, #tpu.memory_space<vmem>>, vector<8x16xf32>
    %c0_146 = arith.constant 0 : index
    %c112 = arith.constant 112 : index
    %150 = vector.load %arg9[%c0_146, %c112] : memref<8x192xf32, #tpu.memory_space<vmem>>, vector<8x16xf32>
    %c0_147 = arith.constant 0 : index
    %c176 = arith.constant 176 : index
    %151 = vector.load %arg9[%c0_147, %c176] : memref<8x192xf32, #tpu.memory_space<vmem>>, vector<8x16xf32>
    %152 = arith.truncf %149 : vector<8x16xf32> to vector<8x16xbf16>
    %153 = arith.truncf %150 : vector<8x16xf32> to vector<8x16xbf16>
    %154 = tpu.transpose %153, [1, 0] : vector<8x16xbf16> -> vector<16x8xbf16>
    %cst_148 = arith.constant dense<0.000000e+00> : vector<8x8xf32>
    %155 = tpu.matmul %152, %154, %cst_148 {dimension_numbers = #tpu.dot_dimension_numbers<[1], [0], [0], [1], [0, 0, 1, 1], [], []>} : vector<8x16xbf16>, vector<16x8xbf16>, vector<8x8xf32> -> vector<8x8xf32>
    %cst_149 = arith.constant 2.500000e-01 : f32
    %156 = vector.broadcast %cst_149 : f32 to vector<8x8xf32>
    %157 = arith.mulf %155, %156 : vector<8x8xf32>
    %c3_150 = arith.constant 3 : index
    %c0_151 = arith.constant 0 : index
    %c0_152 = arith.constant 0 : index
    %158 = vector.load %arg3[%c3_150, %c0_151, %c0_152] : memref<4x16x128xbf16, #tpu.memory_space<vmem>>, vector<1x16x128xbf16>
    %159 = vector.shape_cast %158 : vector<1x16x128xbf16> to vector<16x128xbf16>
    %cst_153 = arith.constant dense<0.000000e+00> : vector<8x128xf32>
    %160 = tpu.matmul %152, %159, %cst_153 {dimension_numbers = #tpu.dot_dimension_numbers<[1], [0], [0], [1], [0, 0, 1, 1], [], []>} : vector<8x16xbf16>, vector<16x128xbf16>, vector<8x128xf32> -> vector<8x128xf32>
    %c0_154 = arith.constant 0 : index
    %c0_155 = arith.constant 0 : index
    %161 = vector.load %arg10[%c0_154, %c0_155] : memref<8x128xf32, #tpu.memory_space<vmem>>, vector<8x128xf32>
    tpu.vector_store %arg10[%c0_154, %c0_155], %160 {strides = array<i32>} : memref<8x128xf32, #tpu.memory_space<vmem>>, vector<8x128xf32>,
    %c0_156 = arith.constant 0 : index
    %c49_157 = arith.constant 49 : index
    %162 = vector.load %arg10[%c0_156, %c49_157] : memref<8x128xf32, #tpu.memory_space<vmem>>, vector<1x8xf32>
    %c0_158 = arith.constant 0 : index
    %c0_159 = arith.constant 0 : index
    %163 = vector.load %arg11[%c0_158, %c0_159] : memref<8x8xf32, #tpu.memory_space<vmem>>, vector<1x8xf32>
    tpu.vector_store %arg11[%c0_158, %c0_159], %162 {strides = array<i32>} : memref<8x8xf32, #tpu.memory_space<vmem>>, vector<1x8xf32>,
    %c1_160 = arith.constant 1 : index
    %c48_161 = arith.constant 48 : index
    %164 = vector.load %arg10[%c1_160, %c48_161] : memref<8x128xf32, #tpu.memory_space<vmem>>, vector<1x8xf32>
    %c1_162 = arith.constant 1 : index
    %c0_163 = arith.constant 0 : index
    %165 = vector.load %arg11[%c1_162, %c0_163] : memref<8x8xf32, #tpu.memory_space<vmem>>, vector<1x8xf32>
    tpu.vector_store %arg11[%c1_162, %c0_163], %164 {strides = array<i32>} : memref<8x8xf32, #tpu.memory_space<vmem>>, vector<1x8xf32>,
    %c2_164 = arith.constant 2 : index
    %c47_165 = arith.constant 47 : index
    %166 = vector.load %arg10[%c2_164, %c47_165] : memref<8x128xf32, #tpu.memory_space<vmem>>, vector<1x8xf32>
    %c2_166 = arith.constant 2 : index
    %c0_167 = arith.constant 0 : index
    %167 = vector.load %arg11[%c2_166, %c0_167] : memref<8x8xf32, #tpu.memory_space<vmem>>, vector<1x8xf32>
    tpu.vector_store %arg11[%c2_166, %c0_167], %166 {strides = array<i32>} : memref<8x8xf32, #tpu.memory_space<vmem>>, vector<1x8xf32>,
    %c3_168 = arith.constant 3 : index
    %c46_169 = arith.constant 46 : index
    %168 = vector.load %arg10[%c3_168, %c46_169] : memref<8x128xf32, #tpu.memory_space<vmem>>, vector<1x8xf32>
    %c3_170 = arith.constant 3 : index
    %c0_171 = arith.constant 0 : index
    %169 = vector.load %arg11[%c3_170, %c0_171] : memref<8x8xf32, #tpu.memory_space<vmem>>, vector<1x8xf32>
    tpu.vector_store %arg11[%c3_170, %c0_171], %168 {strides = array<i32>} : memref<8x8xf32, #tpu.memory_space<vmem>>, vector<1x8xf32>,
    %c4_172 = arith.constant 4 : index
    %c45_173 = arith.constant 45 : index
    %170 = vector.load %arg10[%c4_172, %c45_173] : memref<8x128xf32, #tpu.memory_space<vmem>>, vector<1x8xf32>
    %c4_174 = arith.constant 4 : index
    %c0_175 = arith.constant 0 : index
    %171 = vector.load %arg11[%c4_174, %c0_175] : memref<8x8xf32, #tpu.memory_space<vmem>>, vector<1x8xf32>
    tpu.vector_store %arg11[%c4_174, %c0_175], %170 {strides = array<i32>} : memref<8x8xf32, #tpu.memory_space<vmem>>, vector<1x8xf32>,
    %c5_176 = arith.constant 5 : index
    %c44_177 = arith.constant 44 : index
    %172 = vector.load %arg10[%c5_176, %c44_177] : memref<8x128xf32, #tpu.memory_space<vmem>>, vector<1x8xf32>
    %c5_178 = arith.constant 5 : index
    %c0_179 = arith.constant 0 : index
    %173 = vector.load %arg11[%c5_178, %c0_179] : memref<8x8xf32, #tpu.memory_space<vmem>>, vector<1x8xf32>
    tpu.vector_store %arg11[%c5_178, %c0_179], %172 {strides = array<i32>} : memref<8x8xf32, #tpu.memory_space<vmem>>, vector<1x8xf32>,
    %c6_180 = arith.constant 6 : index
    %c43_181 = arith.constant 43 : index
    %174 = vector.load %arg10[%c6_180, %c43_181] : memref<8x128xf32, #tpu.memory_space<vmem>>, vector<1x8xf32>
    %c6_182 = arith.constant 6 : index
    %c0_183 = arith.constant 0 : index
    %175 = vector.load %arg11[%c6_182, %c0_183] : memref<8x8xf32, #tpu.memory_space<vmem>>, vector<1x8xf32>
    tpu.vector_store %arg11[%c6_182, %c0_183], %174 {strides = array<i32>} : memref<8x8xf32, #tpu.memory_space<vmem>>, vector<1x8xf32>,
    %c7_184 = arith.constant 7 : index
    %c42_185 = arith.constant 42 : index
    %176 = vector.load %arg10[%c7_184, %c42_185] : memref<8x128xf32, #tpu.memory_space<vmem>>, vector<1x8xf32>
    %c7_186 = arith.constant 7 : index
    %c0_187 = arith.constant 0 : index
    %177 = vector.load %arg11[%c7_186, %c0_187] : memref<8x8xf32, #tpu.memory_space<vmem>>, vector<1x8xf32>
    tpu.vector_store %arg11[%c7_186, %c0_187], %176 {strides = array<i32>} : memref<8x8xf32, #tpu.memory_space<vmem>>, vector<1x8xf32>,
    %c0_188 = arith.constant 0 : index
    %c0_189 = arith.constant 0 : index
    %178 = vector.load %arg11[%c0_188, %c0_189] : memref<8x8xf32, #tpu.memory_space<vmem>>, vector<8x8xf32>
    %179 = arith.addf %157, %178 : vector<8x8xf32>
    %cst_190 = arith.constant -1.000000e+30 : f32
    %180 = vector.broadcast %cst_190 : f32 to vector<8x8xf32>
    %181 = arith.select %7, %179, %180 : vector<8x8xi1>, vector<8x8xf32>
    %cst_191 = arith.constant dense<0xFF800000> : vector<8xf32>
    %182 = vector.multi_reduction <maximumf>, %181, %cst_191 [1] : vector<8x8xf32> to vector<8xf32>
    %183 = vector.shape_cast %182 : vector<8xf32> to vector<8x1xf32>
    %184 = vector.broadcast %183 : vector<8x1xf32> to vector<8x8xf32>
    %185 = arith.subf %181, %184 : vector<8x8xf32>
    %186 = math.exp %185 : vector<8x8xf32>
    %cst_192 = arith.constant dense<0.000000e+00> : vector<8xf32>
    %187 = vector.multi_reduction <add>, %186, %cst_192 [1] : vector<8x8xf32> to vector<8xf32>
    %188 = vector.shape_cast %187 : vector<8xf32> to vector<8x1xf32>
    %189 = tpu.reciprocal %188 {approx = true} : vector<8x1xf32> -> vector<8x1xf32>
    %190 = vector.broadcast %189 : vector<8x1xf32> to vector<8x8xf32>
    %191 = arith.mulf %186, %190 : vector<8x8xf32>
    %192 = arith.truncf %191 : vector<8x8xf32> to vector<8x8xbf16>
    %193 = arith.truncf %151 : vector<8x16xf32> to vector<8x16xbf16>
    %cst_193 = arith.constant dense<0.000000e+00> : vector<8x16xf32>
    %194 = tpu.matmul %192, %193, %cst_193 {dimension_numbers = #tpu.dot_dimension_numbers<[1], [0], [0], [1], [0, 0, 1, 1], [], []>} : vector<8x8xbf16>, vector<8x16xbf16>, vector<8x16xf32> -> vector<8x16xf32>
    %c0_194 = arith.constant 0 : index
    %c48_195 = arith.constant 48 : index
    %195 = vector.load %arg12[%c0_194, %c48_195] : memref<8x64xf32, #tpu.memory_space<vmem>>, vector<8x16xf32>
    tpu.vector_store %arg12[%c0_194, %c48_195], %194 {strides = array<i32>} : memref<8x64xf32, #tpu.memory_space<vmem>>, vector<8x16xf32>,
    %c0_196 = arith.constant 0 : index
    %c0_197 = arith.constant 0 : index
    %196 = vector.load %arg12[%c0_196, %c0_197] : memref<8x64xf32, #tpu.memory_space<vmem>>, vector<8x64xf32>
    %197 = arith.truncf %196 : vector<8x64xf32> to vector<8x64xbf16>
    %c0_198 = arith.constant 0 : index
    %c0_199 = arith.constant 0 : index
    %198 = vector.load %arg4[%c0_198, %c0_199] : memref<64x64xbf16, #tpu.memory_space<vmem>>, vector<64x64xbf16>
    %cst_200 = arith.constant dense<0.000000e+00> : vector<8x64xf32>
    %199 = tpu.matmul %197, %198, %cst_200 {dimension_numbers = #tpu.dot_dimension_numbers<[1], [0], [0], [1], [0, 0, 1, 1], [], []>} : vector<8x64xbf16>, vector<64x64xbf16>, vector<8x64xf32> -> vector<8x64xf32>
    %c0_201 = arith.constant 0 : index
    %c0_202 = arith.constant 0 : index
    %200 = vector.load %arg5[%c0_201, %c0_202] : memref<1x64xf32, #tpu.memory_space<vmem>>, vector<1x64xf32>
    %201 = vector.broadcast %200 : vector<1x64xf32> to vector<8x64xf32>
    %202 = arith.addf %199, %201 : vector<8x64xf32>
    %203 = arith.addf %0, %202 : vector<8x64xf32>
    %cst_203 = arith.constant dense<0.000000e+00> : vector<8xf32>
    %204 = vector.multi_reduction <add>, %203, %cst_203 [1] : vector<8x64xf32> to vector<8xf32>
    %205 = vector.shape_cast %204 : vector<8xf32> to vector<8x1xf32>
    %cst_204 = arith.constant 6.400000e+01 : f32
    %206 = vector.broadcast %cst_204 : f32 to vector<8x1xf32>
    %207 = arith.divf %205, %206 : vector<8x1xf32>
    %208 = vector.broadcast %207 : vector<8x1xf32> to vector<8x64xf32>
    %209 = arith.subf %203, %208 : vector<8x64xf32>
    %210 = arith.mulf %209, %209 : vector<8x64xf32>
    %cst_205 = arith.constant dense<0.000000e+00> : vector<8xf32>
    %211 = vector.multi_reduction <add>, %210, %cst_205 [1] : vector<8x64xf32> to vector<8xf32>
    %212 = vector.shape_cast %211 : vector<8xf32> to vector<8x1xf32>
    %cst_206 = arith.constant 6.400000e+01 : f32
    %213 = vector.broadcast %cst_206 : f32 to vector<8x1xf32>
    %214 = arith.divf %212, %213 : vector<8x1xf32>
    %215 = vector.broadcast %207 : vector<8x1xf32> to vector<8x64xf32>
    %216 = arith.subf %203, %215 : vector<8x64xf32>
    %cst_207 = arith.constant 9.99999974E-6 : f32
    %217 = vector.broadcast %cst_207 : f32 to vector<8x1xf32>
    %218 = arith.addf %214, %217 : vector<8x1xf32>
    %219 = math.rsqrt %218 : vector<8x1xf32>
    %220 = vector.broadcast %219 : vector<8x1xf32> to vector<8x64xf32>
    %221 = arith.mulf %216, %220 : vector<8x64xf32>
    %c0_208 = arith.constant 0 : index
    %c0_209 = arith.constant 0 : index
    %222 = vector.load %arg6[%c0_208, %c0_209] : memref<1x64xf32, #tpu.memory_space<vmem>>, vector<1x64xf32>
    %223 = vector.broadcast %222 : vector<1x64xf32> to vector<8x64xf32>
    %224 = arith.mulf %221, %223 : vector<8x64xf32>
    %c0_210 = arith.constant 0 : index
    %c0_211 = arith.constant 0 : index
    %225 = vector.load %arg7[%c0_210, %c0_211] : memref<1x64xf32, #tpu.memory_space<vmem>>, vector<1x64xf32>
    %226 = vector.broadcast %225 : vector<1x64xf32> to vector<8x64xf32>
    %227 = arith.addf %224, %226 : vector<8x64xf32>
    %c0_212 = arith.constant 0 : index
    %c0_213 = arith.constant 0 : index
    %228 = vector.load %arg8[%c0_212, %c0_213] : memref<8x64xf32, #tpu.memory_space<vmem>>, vector<8x64xf32>
    tpu.vector_store %arg8[%c0_212, %c0_213], %227 {strides = array<i32>} : memref<8x64xf32, #tpu.memory_space<vmem>>, vector<8x64xf32>,
    return
  }
  func.func @transform_0(%arg0: i32) -> (i32, i32) {
    %c0_i32 = arith.constant 0 : i32
    %c0_i32_0 = arith.constant 0 : i32
    return %arg0, %c0_i32 : i32, i32
  }
  func.func @transform_1(%arg0: i32) -> (i32, i32) {
    %c0_i32 = arith.constant 0 : i32
    %c0_i32_0 = arith.constant 0 : i32
    %c0_i32_1 = arith.constant 0 : i32
    return %c0_i32, %c0_i32_0 : i32, i32
  }
  func.func @transform_2(%arg0: i32) -> (i32, i32, i32) {
    %c0_i32 = arith.constant 0 : i32
    %c0_i32_0 = arith.constant 0 : i32
    %c0_i32_1 = arith.constant 0 : i32
    %c0_i32_2 = arith.constant 0 : i32
    return %c0_i32, %c0_i32_0, %c0_i32_1 : i32, i32, i32
  }
  func.func @transform_3(%arg0: i32) -> (i32, i32) {
    %c0_i32 = arith.constant 0 : i32
    %c0_i32_0 = arith.constant 0 : i32
    %c0_i32_1 = arith.constant 0 : i32
    return %c0_i32, %c0_i32_0 : i32, i32
  }
  func.func @transform_4(%arg0: i32) -> (i32, i32) {
    %c0_i32 = arith.constant 0 : i32
    %c0_i32_0 = arith.constant 0 : i32
    %c0_i32_1 = arith.constant 0 : i32
    return %c0_i32, %c0_i32_0 : i32, i32
  }
  func.func @transform_5(%arg0: i32) -> (i32, i32) {
    %c0_i32 = arith.constant 0 : i32
    %c0_i32_0 = arith.constant 0 : i32
    %c0_i32_1 = arith.constant 0 : i32
    return %c0_i32, %c0_i32_0 : i32, i32
  }
  func.func @transform_6(%arg0: i32) -> (i32, i32) {
    %c0_i32 = arith.constant 0 : i32
    %c0_i32_0 = arith.constant 0 : i32
    %c0_i32_1 = arith.constant 0 : i32
    return %c0_i32, %c0_i32_0 : i32, i32
  }
  func.func @transform_7(%arg0: i32) -> (i32, i32) {
    %c0_i32 = arith.constant 0 : i32
    %c0_i32_0 = arith.constant 0 : i32
    return %arg0, %c0_i32 : i32, i32
  }
}

</mosaic_0001>

<llo_original>
// kernel: block_forward.3
$region0: #{block_forward.3}
  #allocation0 [shape = 'u32[]', space=smem, size = 0x4, offset = 0x4, fixed_abs, tag = 'smem constant byte address 0x4 - core index']
  #allocation1 [shape = 'u32[144,128]{1,0:T(1,128)}', space=vmem, size = 0x12000, scoped, tag = 'internal scratch']
  %s0 = inlined_call_operand.vmem [shape: f32[16,64], index: 0, kind: input, shape index: {}]
  %s1 = inlined_call_operand.vmem [shape: bf16[64,256], index: 1, kind: input, shape index: {}]
  %s2 = inlined_call_operand.vmem [shape: f32[1,256], index: 2, kind: input, shape index: {}]
  %s3 = inlined_call_operand.vmem [shape: bf16[256,64], index: 3, kind: input, shape index: {}]
  %s4 = inlined_call_operand.vmem [shape: f32[1,64], index: 4, kind: input, shape index: {}]
  %s5 = inlined_call_operand.vmem [shape: bf16[64,256], index: 5, kind: input, shape index: {}]
  %s6 = inlined_call_operand.vmem [shape: f32[1,256], index: 6, kind: input, shape index: {}]
  %s7 = inlined_call_operand.vmem [shape: bf16[256,64], index: 7, kind: input, shape index: {}]
  %s8 = inlined_call_operand.vmem [shape: f32[1,64], index: 8, kind: input, shape index: {}]
  %s9 = inlined_call_operand.vmem [shape: f32[1,64], index: 9, kind: input, shape index: {}]
  %s10 = inlined_call_operand.vmem [shape: f32[1,64], index: 10, kind: input, shape index: {}]
  %s11 = inlined_call_operand.hbm [shape: f32[16,64], index: 11, kind: output, shape index: {}]
  %s12 = sld [smem:[#allocation0]]
  $region54: #{block_forward.3} parent=0
    _
  %s14 = ssub.s32 1, %s12
  %s15 = scalar_select 0, %s14, %s12
  $region1: #{block_forward.3} parent=0
    #allocation2 [shape = 'u8[8192]{0}', space=vmem, size = 0x2000, scoped, tag = 'output window, operand 0, single buffered']
    #allocation3 [shape = 's32[1]{0}', space=sflag, size = 0x4, scoped, tag = 'scoped memory for block_forward.3']
    %16 = vsyncpa [#allocation3], 0
    // Predicated region
    $region2: #{block_forward.3} parent=1 // pred_check
      _
    $region3: #{block_forward.3} parent=1 // pred_check_branch
      %18 = sbr.rel (0) target = $region5
    $region4: #{block_forward.3} parent=1 // pred_region
      _
    $region5: #{block_forward.3} parent=1 // pred_fallthru
      _
    // Predicated region
    $region6: #{block_forward.3} parent=1 // pred_check
      _
    $region7: #{block_forward.3} parent=1 // pred_check_branch
      %20 = sbr.rel (0) target = $region9
    $region8: #{block_forward.3} parent=1 // pred_region
      _
    $region9: #{block_forward.3} parent=1 // pred_fallthru
      _
    // Predicated region
    $region10: #{block_forward.3} parent=1 // pred_check
      _
    $region11: #{block_forward.3} parent=1 // pred_check_branch
      %22 = sbr.rel (0) target = $region13
    $region12: #{block_forward.3} parent=1 // pred_region
      _
    $region13: #{block_forward.3} parent=1 // pred_fallthru
      _
    // Predicated region
    $region14: #{block_forward.3} parent=1 // pred_check
      _
    $region15: #{block_forward.3} parent=1 // pred_check_branch
      %24 = sbr.rel (0) target = $region17
    $region16: #{block_forward.3} parent=1 // pred_region
      _
    $region17: #{block_forward.3} parent=1 // pred_fallthru
      _
    // Predicated region
    $region18: #{block_forward.3} parent=1 // pred_check
      _
    $region19: #{block_forward.3} parent=1 // pred_check_branch
      %26 = sbr.rel (0) target = $region21
    $region20: #{block_forward.3} parent=1 // pred_region
      _
    $region21: #{block_forward.3} parent=1 // pred_fallthru
      _
    // Predicated region
    $region22: #{block_forward.3} parent=1 // pred_check
      _
    $region23: #{block_forward.3} parent=1 // pred_check_branch
      %28 = sbr.rel (0) target = $region25
    $region24: #{block_forward.3} parent=1 // pred_region
      _
    $region25: #{block_forward.3} parent=1 // pred_fallthru
      _
    // Predicated region
    $region26: #{block_forward.3} parent=1 // pred_check
      _
    $region27: #{block_forward.3} parent=1 // pred_check_branch
      %30 = sbr.rel (0) target = $region29
    $region28: #{block_forward.3} parent=1 // pred_region
      _
    $region29: #{block_forward.3} parent=1 // pred_fallthru
      _
    // Predicated region
    $region30: #{block_forward.3} parent=1 // pred_check
      _
    $region31: #{block_forward.3} parent=1 // pred_check_branch
      %32 = sbr.rel (0) target = $region33
    $region32: #{block_forward.3} parent=1 // pred_region
      _
    $region33: #{block_forward.3} parent=1 // pred_fallthru
      _
    // Predicated region
    $region34: #{block_forward.3} parent=1 // pred_check
      _
    $region35: #{block_forward.3} parent=1 // pred_check_branch
      %34 = sbr.rel (0) target = $region37
    $region36: #{block_forward.3} parent=1 // pred_region
      _
    $region37: #{block_forward.3} parent=1 // pred_fallthru
      _
    // Predicated region
    $region38: #{block_forward.3} parent=1 // pred_check
      _
    $region39: #{block_forward.3} parent=1 // pred_check_branch
      %36 = sbr.rel (0) target = $region41
    $region40: #{block_forward.3} parent=1 // pred_region
      _
    $region41: #{block_forward.3} parent=1 // pred_fallthru
      _
    // Predicated region
    $region42: #{block_forward.3} parent=1 // pred_check
      _
    $region43: #{block_forward.3} parent=1 // pred_check_branch
      %38 = sbr.rel (0) target = $region45
    $region44: #{block_forward.3} parent=1 // pred_region
      _
    $region45: #{block_forward.3} parent=1 // pred_fallthru
      _
    %v40 = vld [vmem:[%s0] sm:$0xff]
    %v41 = vld [vmem:[%s0 + $0x8] sm:$0xff]
    %v42 = vpack.c.bf16 %v41, %v40
    %v43 = vld [vmem:[%s1] sm:$0xff]
    %v44 = vld [vmem:[%s1 + $0x8] sm:$0xff]
    %v45 = vld [vmem:[%s1 + $0x10] sm:$0xff]
    %v46 = vld [vmem:[%s1 + $0x18] sm:$0xff]
    %v47 = vld [vmem:[%s1 + $0x20] sm:$0xff]
    %v48 = vld [vmem:[%s1 + $0x28] sm:$0xff]
    %v49 = vld [vmem:[%s1 + $0x30] sm:$0xff]
    %v50 = vld [vmem:[%s1 + $0x38] sm:$0xff]
    %v51 = vld [vmem:[%s2] sm:$0x3]
    %v53 = vlaneseq
    %v54 = vshrl.u32 %v53, 7
    %v55 = vsub.s32 0, %v54
    %v56 = vrot.slane %v51, %v55
    %v57 = vlaneseq
    %v58 = vshrl.u32 %v57, 7
    %v59 = vsub.s32 1, %v58
    %v60 = vrot.slane %v51, %v59
    %v71 = vunpack.c.l.b16 %v43
    %v72 = vunpack.c.h.b16 %v43
    %v73 = vunpack.c.l.b16 %v44
    %v74 = vunpack.c.h.b16 %v44
    %v75 = vunpack.c.l.b16 %v45
    %v76 = vunpack.c.h.b16 %v45
    %v77 = vunpack.c.l.b16 %v46
    %v78 = vunpack.c.h.b16 %v46
    %v79 = vunpack.c.l.b16 %v47
    %v80 = vunpack.c.h.b16 %v47
    %v81 = vunpack.c.l.b16 %v48
    %v82 = vunpack.c.h.b16 %v48
    %v83 = vunpack.c.l.b16 %v49
    %v84 = vunpack.c.h.b16 %v49
    %v85 = vunpack.c.l.b16 %v50
    %v86 = vunpack.c.h.b16 %v50
    %v87 = vpack.c.b16 %v73, %v71
    %v88 = vpack.c.b16 %v74, %v72
    %v89 = vpack.c.b16 %v77, %v75
    %v90 = vpack.c.b16 %v78, %v76
    %v91 = vpack.c.b16 %v81, %v79
    %v92 = vpack.c.b16 %v82, %v80
    %v93 = vpack.c.b16 %v85, %v83
    %v94 = vpack.c.b16 %v86, %v84
    %vm103 = vcmask 523264
    %v105 = vsel %vm103, %v42, 0
    %107 = vmatprep.subr.bf16.mxu0 %v88
    %108 = vmatpush1.bf16.msra.mxu0 %v87
    %109 = vmatprep.subr.bf16.mxu0 %v90
    %110 = vmatpush1.bf16.msra.mxu0 %v89
    %111 = vmatprep.subr.bf16.mxu0 %v92
    %112 = vmatpush1.bf16.msra.mxu0 %v91
    %113 = vmatprep.subr.bf16.mxu0 %v94
    %114 = vmatpush1.bf16.msra.mxu0 %v93
    %115 = vmatprep.subr.bf16.mxu0 0
    %116 = vmatpush1.bf16.msra.mxu0 0
    %117 = vmatprep.subr.bf16.mxu0 0
    %118 = vmatpush1.bf16.msra.mxu0 0
    %119 = vmatprep.subr.bf16.mxu0 0
    %120 = vmatpush1.bf16.msra.mxu0 0
    %121 = vmatprep.subr.bf16.mxu0 0
    %122 = vmatpush1.bf16.msra.mxu0 0
    %123 = vmatprep.subr.bf16.mxu0 0
    %124 = vmatpush1.bf16.msra.mxu0 0
    %125 = vmatprep.subr.bf16.mxu0 0
    %126 = vmatpush1.bf16.msra.mxu0 0
    %127 = vmatprep.subr.bf16.mxu0 0
    %128 = vmatpush1.bf16.msra.mxu0 0
    %129 = vmatprep.subr.bf16.mxu0 0
    %130 = vmatpush1.bf16.msra.mxu0 0
    %131 = vmatprep.subr.bf16.mxu0 0
    %132 = vmatpush1.bf16.msra.mxu0 0
    %133 = vmatprep.subr.bf16.mxu0 0
    %134 = vmatpush1.bf16.msra.mxu0 0
    %135 = vmatprep.subr.bf16.mxu0 0
    %136 = vmatpush1.bf16.msra.mxu0 0
    %137 = vmatprep.subr.bf16.mxu0 0
    %138 = vmatpush1.bf16.msra.mxu0 0
    %139 = vmatprep.mubr.bf16.mxu0 0
    %140 = vmatmul.mubr.bf16.gmra.mrb[0].mxu0 %v105
    %v141 = vpop.f32.mrb[0].mxu0
    %v142 = vadd.f32 %v56, %v141
    %v143 = vpop.f32.mrb[0].mxu0
    %v144 = vadd.f32 %v60, %v143
    %v145 = vpop.f32.mrb[0].mxu0
    %v146 = vadd.f32 %v56, %v145
    %v147 = vpop.f32.mrb[0].mxu0
    %v148 = vadd.f32 %v60, %v147
    %149 = vdwg.mxu0
    %v150 = vmax.f32 %v142, 0.0
    %v151 = vmax.f32 %v144, 0.0
    %v152 = vmax.f32 %v146, 0.0
    %v153 = vmax.f32 %v148, 0.0
    %v154 = vpack.c.bf16 %v152, %v150
    %v155 = vpack.c.bf16 %v153, %v151
    %v156 = vld [vmem:[%s3] sm:$0xf]
    %v157 = vld [vmem:[%s3 + $0x4] sm:$0xf]
    %v158 = vld [vmem:[%s3 + $0x8] sm:$0xf]
    %v159 = vld [vmem:[%s3 + $0xc] sm:$0xf]
    %v160 = vld [vmem:[%s3 + $0x10] sm:$0xf]
    %v161 = vld [vmem:[%s3 + $0x14] sm:$0xf]
    %v162 = vld [vmem:[%s3 + $0x18] sm:$0xf]
    %v163 = vld [vmem:[%s3 + $0x1c] sm:$0xf]
    %v164 = vld [vmem:[%s3 + $0x20] sm:$0xf]
    %v165 = vld [vmem:[%s3 + $0x24] sm:$0xf]
    %v166 = vld [vmem:[%s3 + $0x28] sm:$0xf]
    %v167 = vld [vmem:[%s3 + $0x2c] sm:$0xf]
    %v168 = vld [vmem:[%s3 + $0x30] sm:$0xf]
    %v169 = vld [vmem:[%s3 + $0x34] sm:$0xf]
    %v170 = vld [vmem:[%s3 + $0x38] sm:$0xf]
    %v171 = vld [vmem:[%s3 + $0x3c] sm:$0xf]
    %v172 = vld [vmem:[%s3 + $0x40] sm:$0xf]
    %v173 = vld [vmem:[%s3 + $0x44] sm:$0xf]
    %v174 = vld [vmem:[%s3 + $0x48] sm:$0xf]
    %v175 = vld [vmem:[%s3 + $0x4c] sm:$0xf]
    %v176 = vld [vmem:[%s3 + $0x50] sm:$0xf]
    %v177 = vld [vmem:[%s3 + $0x54] sm:$0xf]
    %v178 = vld [vmem:[%s3 + $0x58] sm:$0xf]
    %v179 = vld [vmem:[%s3 + $0x5c] sm:$0xf]
    %v180 = vld [vmem:[%s3 + $0x60] sm:$0xf]
    %v181 = vld [vmem:[%s3 + $0x64] sm:$0xf]
    %v182 = vld [vmem:[%s3 + $0x68] sm:$0xf]
    %v183 = vld [vmem:[%s3 + $0x6c] sm:$0xf]
    %v184 = vld [vmem:[%s3 + $0x70] sm:$0xf]
    %v185 = vld [vmem:[%s3 + $0x74] sm:$0xf]
    %v186 = vld [vmem:[%s3 + $0x78] sm:$0xf]
    %v187 = vld [vmem:[%s3 + $0x7c] sm:$0xf]
    %v188 = vld [vmem:[%s4] sm:$0x1]
    %v190 = vlaneseq
    %v191 = vshrl.u32 %v190, 7
    %v192 = vsub.s32 0, %v191
    %v193 = vrot.slane %v188, %v192
    %v227 = vunpack.c.l.b16 %v156
    %v228 = vunpack.c.l.b16 %v157
    %v229 = vunpack.c.l.b16 %v158
    %v230 = vunpack.c.l.b16 %v159
    %v231 = vunpack.c.l.b16 %v160
    %v232 = vunpack.c.l.b16 %v161
    %v233 = vunpack.c.l.b16 %v162
    %v234 = vunpack.c.l.b16 %v163
    %v235 = vunpack.c.l.b16 %v164
    %v236 = vunpack.c.l.b16 %v165
    %v237 = vunpack.c.l.b16 %v166
    %v238 = vunpack.c.l.b16 %v167
    %v239 = vunpack.c.l.b16 %v168
    %v240 = vunpack.c.l.b16 %v169
    %v241 = vunpack.c.l.b16 %v170
    %v242 = vunpack.c.l.b16 %v171
    %v243 = vunpack.c.l.b16 %v172
    %v244 = vunpack.c.l.b16 %v173
    %v245 = vunpack.c.l.b16 %v174
    %v246 = vunpack.c.l.b16 %v175
    %v247 = vunpack.c.l.b16 %v176
    %v248 = vunpack.c.l.b16 %v177
    %v249 = vunpack.c.l.b16 %v178
    %v250 = vunpack.c.l.b16 %v179
    %v251 = vunpack.c.l.b16 %v180
    %v252 = vunpack.c.l.b16 %v181
    %v253 = vunpack.c.l.b16 %v182
    %v254 = vunpack.c.l.b16 %v183
    %v255 = vunpack.c.l.b16 %v184
    %v256 = vunpack.c.l.b16 %v185
    %v257 = vunpack.c.l.b16 %v186
    %v258 = vunpack.c.l.b16 %v187
    %v259 = vpack.c.b16 %v228, %v227
    %v260 = vpack.c.b16 %v230, %v229
    %v261 = vpack.c.b16 %v232, %v231
    %v262 = vpack.c.b16 %v234, %v233
    %v263 = vpack.c.b16 %v236, %v235
    %v264 = vpack.c.b16 %v238, %v237
    %v265 = vpack.c.b16 %v240, %v239
    %v266 = vpack.c.b16 %v242, %v241
    %v267 = vpack.c.b16 %v244, %v243
    %v268 = vpack.c.b16 %v246, %v245
    %v269 = vpack.c.b16 %v248, %v247
    %v270 = vpack.c.b16 %v250, %v249
    %v271 = vpack.c.b16 %v252, %v251
    %v272 = vpack.c.b16 %v254, %v253
    %v273 = vpack.c.b16 %v256, %v255
    %v274 = vpack.c.b16 %v258, %v257
    %291 = vmatprep.subr.bf16.mxu0 0
    %292 = vmatpush1.bf16.msra.mxu0 %v259
    %293 = vmatprep.subr.bf16.mxu0 0
    %294 = vmatpush1.bf16.msra.mxu0 %v260
    %295 = vmatprep.subr.bf16.mxu0 0
    %296 = vmatpush1.bf16.msra.mxu0 %v261
    %297 = vmatprep.subr.bf16.mxu0 0
    %298 = vmatpush1.bf16.msra.mxu0 %v262
    %299 = vmatprep.subr.bf16.mxu0 0
    %300 = vmatpush1.bf16.msra.mxu0 %v263
    %301 = vmatprep.subr.bf16.mxu0 0
    %302 = vmatpush1.bf16.msra.mxu0 %v264
    %303 = vmatprep.subr.bf16.mxu0 0
    %304 = vmatpush1.bf16.msra.mxu0 %v265
    %305 = vmatprep.subr.bf16.mxu0 0
    %306 = vmatpush1.bf16.msra.mxu0 %v266
    %307 = vmatprep.subr.bf16.mxu0 0
    %308 = vmatpush1.bf16.msra.mxu0 %v267
    %309 = vmatprep.subr.bf16.mxu0 0
    %310 = vmatpush1.bf16.msra.mxu0 %v268
    %311 = vmatprep.subr.bf16.mxu0 0
    %312 = vmatpush1.bf16.msra.mxu0 %v269
    %313 = vmatprep.subr.bf16.mxu0 0
    %314 = vmatpush1.bf16.msra.mxu0 %v270
    %315 = vmatprep.subr.bf16.mxu0 0
    %316 = vmatpush1.bf16.msra.mxu0 %v271
    %317 = vmatprep.subr.bf16.mxu0 0
    %318 = vmatpush1.bf16.msra.mxu0 %v272
    %319 = vmatprep.subr.bf16.mxu0 0
    %320 = vmatpush1.bf16.msra.mxu0 %v273
    %321 = vmatprep.subr.bf16.mxu0 0
    %322 = vmatpush1.bf16.msra.mxu0 %v274
    %323 = vmatprep.mubr.bf16.mxu0 %v155
    %324 = vmatmul.mubr.bf16.gmra.mrb[0].mxu0 %v154
    %v325 = vpop.f32.mrb[0].mxu0
    %v326 = vadd.f32 %v193, %v325
    %v327 = vpop.f32.mrb[0].mxu0
    %v328 = vpop.f32.mrb[0].mxu0
    %v329 = vadd.f32 %v193, %v328
    %v330 = vpop.f32.mrb[0].mxu0
    %331 = vdwg.mxu0
    %v332 = vpack.c.bf16 %v329, %v326
    %v333 = vld [vmem:[%s5] sm:$0xff]
    %v334 = vld [vmem:[%s5 + $0x8] sm:$0xff]
    %v335 = vld [vmem:[%s5 + $0x10] sm:$0xff]
    %v336 = vld [vmem:[%s5 + $0x18] sm:$0xff]
    %v337 = vld [vmem:[%s5 + $0x20] sm:$0xff]
    %v338 = vld [vmem:[%s5 + $0x28] sm:$0xff]
    %v339 = vld [vmem:[%s5 + $0x30] sm:$0xff]
    %v340 = vld [vmem:[%s5 + $0x38] sm:$0xff]
    %v341 = vld [vmem:[%s6] sm:$0x3]
    %v343 = vlaneseq
    %v344 = vshrl.u32 %v343, 7
    %v345 = vsub.s32 0, %v344
    %v346 = vrot.slane %v341, %v345
    %v347 = vlaneseq
    %v348 = vshrl.u32 %v347, 7
    %v349 = vsub.s32 1, %v348
    %v350 = vrot.slane %v341, %v349
    %v361 = vunpack.c.l.b16 %v333
    %v362 = vunpack.c.h.b16 %v333
    %v363 = vunpack.c.l.b16 %v334
    %v364 = vunpack.c.h.b16 %v334
    %v365 = vunpack.c.l.b16 %v335
    %v366 = vunpack.c.h.b16 %v335
    %v367 = vunpack.c.l.b16 %v336
    %v368 = vunpack.c.h.b16 %v336
    %v369 = vunpack.c.l.b16 %v337
    %v370 = vunpack.c.h.b16 %v337
    %v371 = vunpack.c.l.b16 %v338
    %v372 = vunpack.c.h.b16 %v338
    %v373 = vunpack.c.l.b16 %v339
    %v374 = vunpack.c.h.b16 %v339
    %v375 = vunpack.c.l.b16 %v340
    %v376 = vunpack.c.h.b16 %v340
    %v377 = vpack.c.b16 %v363, %v361
    %v378 = vpack.c.b16 %v364, %v362
    %v379 = vpack.c.b16 %v367, %v365
    %v380 = vpack.c.b16 %v368, %v366
    %v381 = vpack.c.b16 %v371, %v369
    %v382 = vpack.c.b16 %v372, %v370
    %v383 = vpack.c.b16 %v375, %v373
    %v384 = vpack.c.b16 %v376, %v374
    %v394 = vsel %vm103, %v332, 0
    %396 = vmatprep.subr.bf16.mxu0 %v378
    %397 = vmatpush1.bf16.msra.mxu0 %v377
    %398 = vmatprep.subr.bf16.mxu0 %v380
    %399 = vmatpush1.bf16.msra.mxu0 %v379
    %400 = vmatprep.subr.bf16.mxu0 %v382
    %401 = vmatpush1.bf16.msra.mxu0 %v381
    %402 = vmatprep.subr.bf16.mxu0 %v384
    %403 = vmatpush1.bf16.msra.mxu0 %v383
    %404 = vmatprep.subr.bf16.mxu0 0
    %405 = vmatpush1.bf16.msra.mxu0 0
    %406 = vmatprep.subr.bf16.mxu0 0
    %407 = vmatpush1.bf16.msra.mxu0 0
    %408 = vmatprep.subr.bf16.mxu0 0
    %409 = vmatpush1.bf16.msra.mxu0 0
    %410 = vmatprep.subr.bf16.mxu0 0
    %411 = vmatpush1.bf16.msra.mxu0 0
    %412 = vmatprep.subr.bf16.mxu0 0
    %413 = vmatpush1.bf16.msra.mxu0 0
    %414 = vmatprep.subr.bf16.mxu0 0
    %415 = vmatpush1.bf16.msra.mxu0 0
    %416 = vmatprep.subr.bf16.mxu0 0
    %417 = vmatpush1.bf16.msra.mxu0 0
    %418 = vmatprep.subr.bf16.mxu0 0
    %419 = vmatpush1.bf16.msra.mxu0 0
    %420 = vmatprep.subr.bf16.mxu0 0
    %421 = vmatpush1.bf16.msra.mxu0 0
    %422 = vmatprep.subr.bf16.mxu0 0
    %423 = vmatpush1.bf16.msra.mxu0 0
    %424 = vmatprep.subr.bf16.mxu0 0
    %425 = vmatpush1.bf16.msra.mxu0 0
    %426 = vmatprep.subr.bf16.mxu0 0
    %427 = vmatpush1.bf16.msra.mxu0 0
    %428 = vmatprep.mubr.bf16.mxu0 0
    %429 = vmatmul.mubr.bf16.gmra.mrb[0].mxu0 %v394
    %v430 = vpop.f32.mrb[0].mxu0
    %v431 = vadd.f32 %v346, %v430
    %v432 = vpop.f32.mrb[0].mxu0
    %v433 = vadd.f32 %v350, %v432
    %v434 = vpop.f32.mrb[0].mxu0
    %v435 = vadd.f32 %v346, %v434
    %v436 = vpop.f32.mrb[0].mxu0
    %v437 = vadd.f32 %v350, %v436
    %438 = vdwg.mxu0
    %v439 = vmax.f32 %v431, 0.0
    %v440 = vmax.f32 %v433, 0.0
    %v441 = vmax.f32 %v435, 0.0
    %v442 = vmax.f32 %v437, 0.0
    %v443 = vpack.c.bf16 %v441, %v439
    %v444 = vpack.c.bf16 %v442, %v440
    %v445 = vld [vmem:[%s7] sm:$0xf]
    %v446 = vld [vmem:[%s7 + $0x4] sm:$0xf]
    %v447 = vld [vmem:[%s7 + $0x8] sm:$0xf]
    %v448 = vld [vmem:[%s7 + $0xc] sm:$0xf]
    %v449 = vld [vmem:[%s7 + $0x10] sm:$0xf]
    %v450 = vld [vmem:[%s7 + $0x14] sm:$0xf]
    %v451 = vld [vmem:[%s7 + $0x18] sm:$0xf]
    %v452 = vld [vmem:[%s7 + $0x1c] sm:$0xf]
    %v453 = vld [vmem:[%s7 + $0x20] sm:$0xf]
    %v454 = vld [vmem:[%s7 + $0x24] sm:$0xf]
    %v455 = vld [vmem:[%s7 + $0x28] sm:$0xf]
    %v456 = vld [vmem:[%s7 + $0x2c] sm:$0xf]
    %v457 = vld [vmem:[%s7 + $0x30] sm:$0xf]
    %v458 = vld [vmem:[%s7 + $0x34] sm:$0xf]
    %v459 = vld [vmem:[%s7 + $0x38] sm:$0xf]
    %v460 = vld [vmem:[%s7 + $0x3c] sm:$0xf]
    %v461 = vld [vmem:[%s7 + $0x40] sm:$0xf]
    %v462 = vld [vmem:[%s7 + $0x44] sm:$0xf]
    %v463 = vld [vmem:[%s7 + $0x48] sm:$0xf]
    %v464 = vld [vmem:[%s7 + $0x4c] sm:$0xf]
    %v465 = vld [vmem:[%s7 + $0x50] sm:$0xf]
    %v466 = vld [vmem:[%s7 + $0x54] sm:$0xf]
    %v467 = vld [vmem:[%s7 + $0x58] sm:$0xf]
    %v468 = vld [vmem:[%s7 + $0x5c] sm:$0xf]
    %v469 = vld [vmem:[%s7 + $0x60] sm:$0xf]
    %v470 = vld [vmem:[%s7 + $0x64] sm:$0xf]
    %v471 = vld [vmem:[%s7 + $0x68] sm:$0xf]
    %v472 = vld [vmem:[%s7 + $0x6c] sm:$0xf]
    %v473 = vld [vmem:[%s7 + $0x70] sm:$0xf]
    %v474 = vld [vmem:[%s7 + $0x74] sm:$0xf]
    %v475 = vld [vmem:[%s7 + $0x78] sm:$0xf]
    %v476 = vld [vmem:[%s7 + $0x7c] sm:$0xf]
    %v477 = vld [vmem:[%s8] sm:$0x1]
    %v479 = vlaneseq
    %v480 = vshrl.u32 %v479, 7
    %v481 = vsub.s32 0, %v480
    %v482 = vrot.slane %v477, %v481
    %v516 = vunpack.c.l.b16 %v445
    %v517 = vunpack.c.l.b16 %v446
    %v518 = vunpack.c.l.b16 %v447
    %v519 = vunpack.c.l.b16 %v448
    %v520 = vunpack.c.l.b16 %v449
    %v521 = vunpack.c.l.b16 %v450
    %v522 = vunpack.c.l.b16 %v451
    %v523 = vunpack.c.l.b16 %v452
    %v524 = vunpack.c.l.b16 %v453
    %v525 = vunpack.c.l.b16 %v454
    %v526 = vunpack.c.l.b16 %v455
    %v527 = vunpack.c.l.b16 %v456
    %v528 = vunpack.c.l.b16 %v457
    %v529 = vunpack.c.l.b16 %v458
    %v530 = vunpack.c.l.b16 %v459
    %v531 = vunpack.c.l.b16 %v460
    %v532 = vunpack.c.l.b16 %v461
    %v533 = vunpack.c.l.b16 %v462
    %v534 = vunpack.c.l.b16 %v463
    %v535 = vunpack.c.l.b16 %v464
    %v536 = vunpack.c.l.b16 %v465
    %v537 = vunpack.c.l.b16 %v466
    %v538 = vunpack.c.l.b16 %v467
    %v539 = vunpack.c.l.b16 %v468
    %v540 = vunpack.c.l.b16 %v469
    %v541 = vunpack.c.l.b16 %v470
    %v542 = vunpack.c.l.b16 %v471
    %v543 = vunpack.c.l.b16 %v472
    %v544 = vunpack.c.l.b16 %v473
    %v545 = vunpack.c.l.b16 %v474
    %v546 = vunpack.c.l.b16 %v475
    %v547 = vunpack.c.l.b16 %v476
    %v548 = vpack.c.b16 %v517, %v516
    %v549 = vpack.c.b16 %v519, %v518
    %v550 = vpack.c.b16 %v521, %v520
    %v551 = vpack.c.b16 %v523, %v522
    %v552 = vpack.c.b16 %v525, %v524
    %v553 = vpack.c.b16 %v527, %v526
    %v554 = vpack.c.b16 %v529, %v528
    %v555 = vpack.c.b16 %v531, %v530
    %v556 = vpack.c.b16 %v533, %v532
    %v557 = vpack.c.b16 %v535, %v534
    %v558 = vpack.c.b16 %v537, %v536
    %v559 = vpack.c.b16 %v539, %v538
    %v560 = vpack.c.b16 %v541, %v540
    %v561 = vpack.c.b16 %v543, %v542
    %v562 = vpack.c.b16 %v545, %v544
    %v563 = vpack.c.b16 %v547, %v546
    %580 = vmatprep.subr.bf16.mxu0 0
    %581 = vmatpush1.bf16.msra.mxu0 %v548
    %582 = vmatprep.subr.bf16.mxu0 0
    %583 = vmatpush1.bf16.msra.mxu0 %v549
    %584 = vmatprep.subr.bf16.mxu0 0
    %585 = vmatpush1.bf16.msra.mxu0 %v550
    %586 = vmatprep.subr.bf16.mxu0 0
    %587 = vmatpush1.bf16.msra.mxu0 %v551
    %588 = vmatprep.subr.bf16.mxu0 0
    %589 = vmatpush1.bf16.msra.mxu0 %v552
    %590 = vmatprep.subr.bf16.mxu0 0
    %591 = vmatpush1.bf16.msra.mxu0 %v553
    %592 = vmatprep.subr.bf16.mxu0 0
    %593 = vmatpush1.bf16.msra.mxu0 %v554
    %594 = vmatprep.subr.bf16.mxu0 0
    %595 = vmatpush1.bf16.msra.mxu0 %v555
    %596 = vmatprep.subr.bf16.mxu0 0
    %597 = vmatpush1.bf16.msra.mxu0 %v556
    %598 = vmatprep.subr.bf16.mxu0 0
    %599 = vmatpush1.bf16.msra.mxu0 %v557
    %600 = vmatprep.subr.bf16.mxu0 0
    %601 = vmatpush1.bf16.msra.mxu0 %v558
    %602 = vmatprep.subr.bf16.mxu0 0
    %603 = vmatpush1.bf16.msra.mxu0 %v559
    %604 = vmatprep.subr.bf16.mxu0 0
    %605 = vmatpush1.bf16.msra.mxu0 %v560
    %606 = vmatprep.subr.bf16.mxu0 0
    %607 = vmatpush1.bf16.msra.mxu0 %v561
    %608 = vmatprep.subr.bf16.mxu0 0
    %609 = vmatpush1.bf16.msra.mxu0 %v562
    %610 = vmatprep.subr.bf16.mxu0 0
    %611 = vmatpush1.bf16.msra.mxu0 %v563
    %612 = vmatprep.mubr.bf16.mxu0 %v444
    %613 = vmatmul.mubr.bf16.gmra.mrb[0].mxu0 %v443
    %v614 = vpop.f32.mrb[0].mxu0
    %v615 = vadd.f32 %v482, %v614
    %v616 = vpop.f32.mrb[0].mxu0
    %v617 = vpop.f32.mrb[0].mxu0
    %v618 = vadd.f32 %v482, %v617
    %v619 = vpop.f32.mrb[0].mxu0
    %620 = vdwg.mxu0
    %v621 = vadd.f32 %v40, %v615
    %v622 = vadd.f32 %v41, %v618
    %v623 = vsel %vm103, %v621, 0.0
    %624 = vadd.xlane.f32.xlu0 %v623
    %v625 = vpop.xlane.xlu0 %624
    %v626 = vsel %vm103, %v622, 0.0
    %627 = vadd.xlane.f32.xlu0 %v626
    %v628 = vpop.xlane.xlu0 %627
    %v629 = vrcp.pop 64.0
    %v630 = vmul.f32 %v625, %v629
    %v631 = vmul.f32 %v628, %v629
    %v632 = vsub.f32 %v621, %v630
    %v633 = vsub.f32 %v622, %v631
    %v634 = vmul.f32 %v632, %v632
    %v635 = vmul.f32 %v633, %v633
    %v636 = vsel %vm103, %v634, 0.0
    %637 = vadd.xlane.f32.xlu0 %v636
    %v638 = vpop.xlane.xlu0 %637
    %v639 = vsel %vm103, %v635, 0.0
    %640 = vadd.xlane.f32.xlu0 %v639
    %v641 = vpop.xlane.xlu0 %640
    %v642 = vmul.f32 %v638, %v629
    %v643 = vmul.f32 %v641, %v629
    %v644 = vadd.f32 %v642, 1e-05
    %v645 = vadd.f32 %v643, 1e-05
    %v646 = vrsqrt.pop %v644
    %v647 = vrsqrt.pop %v645
    %v648 = vmul.f32 %v632, %v646
    %v649 = vmul.f32 %v633, %v647
    %v650 = vld [vmem:[%s9] sm:$0x1]
    %v652 = vlaneseq
    %v653 = vshrl.u32 %v652, 7
    %v654 = vsub.s32 0, %v653
    %v655 = vrot.slane %v650, %v654
    %v657 = vmul.f32 %v648, %v655
    %v658 = vmul.f32 %v649, %v655
    %v659 = vld [vmem:[%s10] sm:$0x1]
    %v661 = vlaneseq
    %v662 = vshrl.u32 %v661, 7
    %v663 = vsub.s32 0, %v662
    %v664 = vrot.slane %v659, %v663
    %v666 = vadd.f32 %v657, %v664
    %v667 = vadd.f32 %v658, %v664
    %668 = vst.msk [vmem:[#allocation2] sm:$0xff] %vm103, %v666
    %669 = vst.msk [vmem:[#allocation2 + $0x8] sm:$0xff] %vm103, %v667
    // Predicated region
    $region46: #{block_forward.3} parent=1 // pred_check
      _
    $region47: #{block_forward.3} parent=1 // pred_check_branch
      %671 = sbr.rel (0) target = $region49
    $region48: #{block_forward.3} parent=1 // pred_region
      %s673 = ssub.s32 256, 256
      %674 = vsyncadd [#allocation3], %s673
      %s675 = sshll.u32 [#allocation2], 4
      %s676 = int_to_ptr.vmem [resolvable:$true] %s675
      %681 = dma.vmem_to_hbm [thread:$0]  %s676, 256, %s11, [#allocation3], 128, 128, 8
    $region49: #{block_forward.3} parent=1 // pred_fallthru
      _
    // Predicated region
    $region50: #{block_forward.3} parent=1 // pred_check
      _
    $region51: #{block_forward.3} parent=1 // pred_check_branch
      %683 = sbr.rel (0) target = $region53
    $region52: #{block_forward.3} parent=1 // pred_region
      %684 = dma.done [#allocation3], 256
    $region53: #{block_forward.3} parent=1 // pred_fallthru
      _
    %685 = vsyncpa [#allocation3], 1

// kernel: block_forward.2
$region0: #{block_forward.2}
  #allocation0 [shape = 'u32[]', space=smem, size = 0x4, offset = 0x4, fixed_abs, tag = 'smem constant byte address 0x4 - core index']
  #allocation1 [shape = 'u32[144,128]{1,0:T(1,128)}', space=vmem, size = 0x12000, scoped, tag = 'internal scratch']
  #allocation2 [shape = 'f32[8,192]{1,0:T(8,128)}', space=vmem, size = 0x2000, scoped, tag = 'scratch operand']
  #allocation3 [shape = 'f32[8,128]{1,0:T(8,128)}', space=vmem, size = 0x1000, scoped, tag = 'scratch operand']
  #allocation4 [shape = 'f32[8,8]{1,0:T(8,128)}', space=vmem, size = 0x1000, scoped, tag = 'scratch operand']
  #allocation5 [shape = 'f32[8,64]{1,0:T(8,128)}', space=vmem, size = 0x1000, scoped, tag = 'scratch operand']
  %s0 = inlined_call_operand.vmem [shape: f32[16,64], index: 0, kind: input, shape index: {}]
  %s1 = inlined_call_operand.vmem [shape: bf16[64,192], index: 1, kind: input, shape index: {}]
  %s2 = inlined_call_operand.vmem [shape: bf16[4,16,128], index: 2, kind: input, shape index: {}]
  %s3 = inlined_call_operand.vmem [shape: bf16[64,64], index: 3, kind: input, shape index: {}]
  %s4 = inlined_call_operand.vmem [shape: f32[1,64], index: 4, kind: input, shape index: {}]
  %s5 = inlined_call_operand.vmem [shape: f32[1,64], index: 5, kind: input, shape index: {}]
  %s6 = inlined_call_operand.vmem [shape: f32[1,64], index: 6, kind: input, shape index: {}]
  %s7 = inlined_call_operand.vmem [shape: f32[16,64], index: 7, kind: output, shape index: {}]
  %s8 = sld [smem:[#allocation0]]
  $region61: #{block_forward.2} parent=0
    _
  %s10 = ssub.s32 1, %s8
  %s11 = scalar_select 0, %s10, %s8
  loop: start=0, step=1, limit=4
  $region2: #{block_forward.2} parent=0 // loop_pre_header
    _
  $region3: #{block_forward.2} parent=0 // loop_header
    %s13 = sphi 0, %s17
    %p14 = scmp.ge.s32.totalorder %s13, 4
    %s23 = sphi 0, %s25
    %s26 = sphi 0, %s23
    %s27 = sphi 0, %s26
    %s43 = sphi 0, %s27
    %s47 = sphi 0, %s47
    %s49 = sphi 0, %s47
    %s50 = sphi 0, %s49
    %s64 = sphi 0, %s50
    %s68 = sphi 0, %s68
    %s70 = sphi 0, %s68
    %s71 = sphi 0, %s70
    %s85 = sphi 0, %s71
    %s89 = sphi 0, %s89
    %s91 = sphi 0, %s89
    %s92 = sphi 0, %s91
    %s106 = sphi 0, %s92
    %s110 = sphi 0, %s110
    %s112 = sphi 0, %s110
    %s113 = sphi 0, %s112
    %s127 = sphi 0, %s113
    %s131 = sphi 0, %s131
    %s133 = sphi 0, %s131
    %s134 = sphi 0, %s133
    %s148 = sphi 0, %s134
    %s152 = sphi 0, %s152
    %s154 = sphi 0, %s152
    %s155 = sphi 0, %s154
    %s169 = sphi 0, %s155
    %s175 = sphi 0, %s177
    %s178 = sphi 0, %s175
    %s179 = sphi 0, %s178
    %s195 = sphi 0, %s179
  $region4: #{block_forward.2} parent=0 // loop_header_branch
    %16 = sbr.rel (%p14) target = $region8
  $region5: #{block_forward.2} parent=0 // loop_body
    %s18 = ssub.s32 %s13, 1
    %s19 = ssub.s32 %s13, 2
    %s20 = sadd.s32 %s13, 1
    %s21 = ssub.s32 %s13, %s20
    %p22 = scmp.eq.s32.totalorder %s21, 0
    %s24 = sadd.s32 %s23, 1
    %s25 = scalar_select %p22, %s23, %s24
    %p28 = pneg %p22
    %p29 = scmp.eq.s32.totalorder %s13, 1
    %p30 = por %p28, %p29
    %p31 = scmp.ne.s32.totalorder %s23, %s26
    %p32 = scmp.eq.s32.totalorder %s13, 0
    %p33 = por %p31, %p32
    %p34 = scmp.ne.s32.totalorder %s23, %s26
    %p35 = scmp.eq.s32.totalorder %s18, 1
    %p36 = por %p34, %p35
    %p37 = scmp.ne.s32.totalorder %s26, %s27
    %p38 = scmp.eq.s32.totalorder %s18, 0
    %p39 = por %p37, %p38
    %p40 = scmp.ne.s32.totalorder %s26, %s27
    %p41 = scmp.eq.s32.totalorder %s19, 1
    %p42 = por %p40, %p41
    %p44 = scmp.ne.s32.totalorder %s27, %s43
    %p45 = scmp.eq.s32.totalorder %s19, 0
    %p46 = por %p44, %p45
    %s48 = sadd.s32 %s47, 1
    %p51 = scmp.eq.s32.totalorder %s13, 1
    %p52 = scmp.ne.s32.totalorder %s47, %s49
    %p53 = scmp.eq.s32.totalorder %s13, 0
    %p54 = por %p52, %p53
    %p55 = scmp.ne.s32.totalorder %s47, %s49
    %p56 = scmp.eq.s32.totalorder %s18, 1
    %p57 = por %p55, %p56
    %p58 = scmp.ne.s32.totalorder %s49, %s50
    %p59 = scmp.eq.s32.totalorder %s18, 0
    %p60 = por %p58, %p59
    %p61 = scmp.ne.s32.totalorder %s49, %s50
    %p62 = scmp.eq.s32.totalorder %s19, 1
    %p63 = por %p61, %p62
    %p65 = scmp.ne.s32.totalorder %s50, %s64
    %p66 = scmp.eq.s32.totalorder %s19, 0
    %p67 = por %p65, %p66
    %s69 = sadd.s32 %s68, 1
    %p72 = scmp.eq.s32.totalorder %s13, 1
    %p73 = scmp.ne.s32.totalorder %s68, %s70
    %p74 = scmp.eq.s32.totalorder %s13, 0
    %p75 = por %p73, %p74
    %p76 = scmp.ne.s32.totalorder %s68, %s70
    %p77 = scmp.eq.s32.totalorder %s18, 1
    %p78 = por %p76, %p77
    %p79 = scmp.ne.s32.totalorder %s70, %s71
    %p80 = scmp.eq.s32.totalorder %s18, 0
    %p81 = por %p79, %p80
    %p82 = scmp.ne.s32.totalorder %s70, %s71
    %p83 = scmp.eq.s32.totalorder %s19, 1
    %p84 = por %p82, %p83
    %p86 = scmp.ne.s32.totalorder %s71, %s85
    %p87 = scmp.eq.s32.totalorder %s19, 0
    %p88 = por %p86, %p87
    %s90 = sadd.s32 %s89, 1
    %p93 = scmp.eq.s32.totalorder %s13, 1
    %p94 = scmp.ne.s32.totalorder %s89, %s91
    %p95 = scmp.eq.s32.totalorder %s13, 0
    %p96 = por %p94, %p95
    %p97 = scmp.ne.s32.totalorder %s89, %s91
    %p98 = scmp.eq.s32.totalorder %s18, 1
    %p99 = por %p97, %p98
    %p100 = scmp.ne.s32.totalorder %s91, %s92
    %p101 = scmp.eq.s32.totalorder %s18, 0
    %p102 = por %p100, %p101
    %p103 = scmp.ne.s32.totalorder %s91, %s92
    %p104 = scmp.eq.s32.totalorder %s19, 1
    %p105 = por %p103, %p104
    %p107 = scmp.ne.s32.totalorder %s92, %s106
    %p108 = scmp.eq.s32.totalorder %s19, 0
    %p109 = por %p107, %p108
    %s111 = sadd.s32 %s110, 1
    %p114 = scmp.eq.s32.totalorder %s13, 1
    %p115 = scmp.ne.s32.totalorder %s110, %s112
    %p116 = scmp.eq.s32.totalorder %s13, 0
    %p117 = por %p115, %p116
    %p118 = scmp.ne.s32.totalorder %s110, %s112
    %p119 = scmp.eq.s32.totalorder %s18, 1
    %p120 = por %p118, %p119
    %p121 = scmp.ne.s32.totalorder %s112, %s113
    %p122 = scmp.eq.s32.totalorder %s18, 0
    %p123 = por %p121, %p122
    %p124 = scmp.ne.s32.totalorder %s112, %s113
    %p125 = scmp.eq.s32.totalorder %s19, 1
    %p126 = por %p124, %p125
    %p128 = scmp.ne.s32.totalorder %s113, %s127
    %p129 = scmp.eq.s32.totalorder %s19, 0
    %p130 = por %p128, %p129
    %s132 = sadd.s32 %s131, 1
    %p135 = scmp.eq.s32.totalorder %s13, 1
    %p136 = scmp.ne.s32.totalorder %s131, %s133
    %p137 = scmp.eq.s32.totalorder %s13, 0
    %p138 = por %p136, %p137
    %p139 = scmp.ne.s32.totalorder %s131, %s133
    %p140 = scmp.eq.s32.totalorder %s18, 1
    %p141 = por %p139, %p140
    %p142 = scmp.ne.s32.totalorder %s133, %s134
    %p143 = scmp.eq.s32.totalorder %s18, 0
    %p144 = por %p142, %p143
    %p145 = scmp.ne.s32.totalorder %s133, %s134
    %p146 = scmp.eq.s32.totalorder %s19, 1
    %p147 = por %p145, %p146
    %p149 = scmp.ne.s32.totalorder %s134, %s148
    %p150 = scmp.eq.s32.totalorder %s19, 0
    %p151 = por %p149, %p150
    %s153 = sadd.s32 %s152, 1
    %p156 = scmp.eq.s32.totalorder %s13, 1
    %p157 = scmp.ne.s32.totalorder %s152, %s154
    %p158 = scmp.eq.s32.totalorder %s13, 0
    %p159 = por %p157, %p158
    %p160 = scmp.ne.s32.totalorder %s152, %s154
    %p161 = scmp.eq.s32.totalorder %s18, 1
    %p162 = por %p160, %p161
    %p163 = scmp.ne.s32.totalorder %s154, %s155
    %p164 = scmp.eq.s32.totalorder %s18, 0
    %p165 = por %p163, %p164
    %p166 = scmp.ne.s32.totalorder %s154, %s155
    %p167 = scmp.eq.s32.totalorder %s19, 1
    %p168 = por %p166, %p167
    %p170 = scmp.ne.s32.totalorder %s155, %s169
    %p171 = scmp.eq.s32.totalorder %s19, 0
    %p172 = por %p170, %p171
    %s173 = ssub.s32 %s13, %s20
    %p174 = scmp.eq.s32.totalorder %s173, 0
    %s176 = sadd.s32 %s175, 1
    %s177 = scalar_select %p174, %s175, %s176
    %p180 = pneg %p174
    %p181 = scmp.eq.s32.totalorder %s13, 1
    %p182 = por %p180, %p181
    %p183 = scmp.ne.s32.totalorder %s175, %s178
    %p184 = scmp.eq.s32.totalorder %s13, 0
    %p185 = por %p183, %p184
    %p186 = scmp.ne.s32.totalorder %s175, %s178
    %p187 = scmp.eq.s32.totalorder %s18, 1
    %p188 = por %p186, %p187
    %p189 = scmp.ne.s32.totalorder %s178, %s179
    %p190 = scmp.eq.s32.totalorder %s18, 0
    %p191 = por %p189, %p190
    %p192 = scmp.ne.s32.totalorder %s178, %s179
    %p193 = scmp.eq.s32.totalorder %s19, 1
    %p194 = por %p192, %p193
    %p196 = scmp.ne.s32.totalorder %s179, %s195
    %p197 = scmp.eq.s32.totalorder %s19, 0
    %p198 = por %p196, %p197
    %p199 = scmp.le.s32.totalorder 1, %s13
    %p200 = scmp.lt.s32.totalorder %s13, 3
    %p201 = pnand %p199, %p200
    %p202 = pneg %p201
    // Predicated region
    $region9: #{block_forward.2} parent=5 // pred_check
      _
    $region10: #{block_forward.2} parent=5 // pred_check_branch
      %204 = sbr.rel (%p201) target = $region12
    $region11: #{block_forward.2} parent=5 // pred_region
      %s205 = ssub.s32 %s13, 1
      // Predicated region
      $region13: #{block_forward.2} parent=11 // pred_check
        %p206 = pneg %p60
      $region14: #{block_forward.2} parent=11 // pred_check_branch
        %208 = sbr.rel (%p206) target = $region16
      $region15: #{block_forward.2} parent=11 // pred_region
        _
      $region16: #{block_forward.2} parent=11 // pred_fallthru
        _
      // Predicated region
      $region17: #{block_forward.2} parent=11 // pred_check
        %p209 = pneg %p81
      $region18: #{block_forward.2} parent=11 // pred_check_branch
        %211 = sbr.rel (%p209) target = $region20
      $region19: #{block_forward.2} parent=11 // pred_region
        _
      $region20: #{block_forward.2} parent=11 // pred_fallthru
        _
      // Predicated region
      $region21: #{block_forward.2} parent=11 // pred_check
        %p212 = pneg %p102
      $region22: #{block_forward.2} parent=11 // pred_check_branch
        %214 = sbr.rel (%p212) target = $region24
      $region23: #{block_forward.2} parent=11 // pred_region
        _
      $region24: #{block_forward.2} parent=11 // pred_fallthru
        _
      // Predicated region
      $region25: #{block_forward.2} parent=11 // pred_check
        %p215 = pneg %p123
      $region26: #{block_forward.2} parent=11 // pred_check_branch
        %217 = sbr.rel (%p215) target = $region28
      $region27: #{block_forward.2} parent=11 // pred_region
        _
      $region28: #{block_forward.2} parent=11 // pred_fallthru
        _
      // Predicated region
      $region29: #{block_forward.2} parent=11 // pred_check
        %p218 = pneg %p144
      $region30: #{block_forward.2} parent=11 // pred_check_branch
        %220 = sbr.rel (%p218) target = $region32
      $region31: #{block_forward.2} parent=11 // pred_region
        _
      $region32: #{block_forward.2} parent=11 // pred_fallthru
        _
      // Predicated region
      $region33: #{block_forward.2} parent=11 // pred_check
        %p221 = pneg %p165
      $region34: #{block_forward.2} parent=11 // pred_check_branch
        %223 = sbr.rel (%p221) target = $region36
      $region35: #{block_forward.2} parent=11 // pred_region
        _
      $region36: #{block_forward.2} parent=11 // pred_fallthru
        _
    $region12: #{block_forward.2} parent=5 // pred_fallthru
      _
    %p224 = scmp.lt.s32.totalorder %s13, 2
    // Predicated region
    $region37: #{block_forward.2} parent=5 // pred_check
      %p225 = pneg %p224
    $region38: #{block_forward.2} parent=5 // pred_check_branch
      %227 = sbr.rel (%p225) target = $region40
    $region39: #{block_forward.2} parent=5 // pred_region
      // Predicated region
      $region41: #{block_forward.2} parent=39 // pred_check
        %p228 = pneg %p33
      $region42: #{block_forward.2} parent=39 // pred_check_branch
        %230 = sbr.rel (%p228) target = $region44
      $region43: #{block_forward.2} parent=39 // pred_region
        %p231 = scmp.lt.s32.totalorder %s13, 1
        %s232 = scalar_select %p231, %s13, 1
        %s233 = smul.addr %s232, 8
        %s234 = scalar_lea.vmem %s0, %s233
      $region44: #{block_forward.2} parent=39 // pred_fallthru
        _
    $region40: #{block_forward.2} parent=5 // pred_fallthru
      _
    %p235 = scmp.le.s32.totalorder 1, %s13
    %p236 = scmp.lt.s32.totalorder %s13, 3
    %p237 = pnand %p235, %p236
    %p238 = pneg %p237
    // Predicated region
    $region45: #{block_forward.2} parent=5 // pred_check
      _
    $region46: #{block_forward.2} parent=5 // pred_check_branch
      %240 = sbr.rel (%p237) target = $region48
    $region47: #{block_forward.2} parent=5 // pred_region
      %s241 = ssub.s32 %s13, 1
      %p242 = scmp.lt.s32.totalorder %s18, 1
      %s243 = scalar_select %p242, %s18, 1
      %s244 = smul.addr %s243, 8
      %s245 = scalar_lea.vmem %s0, %s244
      %p246 = pneg %p39
      %p247 = pneg %p36
      %p248 = pneg %p60
      %p249 = pneg %p57
      %p250 = pneg %p81
      %p251 = pneg %p78
      %p252 = pneg %p102
      %p253 = pneg %p99
      %p254 = pneg %p123
      %p255 = pneg %p120
      %p256 = pneg %p144
      %p257 = pneg %p141
      %p258 = pneg %p165
      %p259 = pneg %p162
      %p260 = pneg %p191
      %p261 = pneg %p188
      %p262 = scmp.lt.s32.totalorder %s18, 1
      %s263 = scalar_select %p262, %s18, 1
      %s264 = smul.addr %s263, 8
      %s265 = scalar_lea.vmem %s7, %s264
      %p266 = scmp.lt.s32.totalorder %s18, 1
      %s267 = scalar_select %p266, %s18, 1
      %s268 = smul.addr %s267, 8
      %s269 = scalar_lea.vmem %s0, %s268
      %p270 = scmp.lt.s32.totalorder %s18, 1
      %s271 = scalar_select %p270, %s18, 1
      %s272 = smul.addr %s271, 8
      %s273 = scalar_lea.vmem %s7, %s272
      %v275 = vld [vmem:[%s269] sm:$0xff]
      %v276 = vpack.c.bf16 %v275, %v275
      %v277 = vld [vmem:[%s1] sm:$0xff]
      %v278 = vld [vmem:[%s1 + $0x8] sm:$0xff]
      %v279 = vld [vmem:[%s1 + $0x10] sm:$0xff]
      %v280 = vld [vmem:[%s1 + $0x18] sm:$0xff]
      %v281 = vld [vmem:[%s1 + $0x20] sm:$0xff]
      %v282 = vld [vmem:[%s1 + $0x28] sm:$0xff]
      %v283 = vld [vmem:[%s1 + $0x30] sm:$0xff]
      %v284 = vld [vmem:[%s1 + $0x38] sm:$0xff]
      %v293 = vunpack.c.l.b16 %v277
      %v294 = vunpack.c.h.b16 %v277
      %v295 = vunpack.c.l.b16 %v278
      %v296 = vunpack.c.h.b16 %v278
      %v297 = vunpack.c.l.b16 %v279
      %v298 = vunpack.c.h.b16 %v279
      %v299 = vunpack.c.l.b16 %v280
      %v300 = vunpack.c.h.b16 %v280
      %v301 = vunpack.c.l.b16 %v281
      %v302 = vunpack.c.h.b16 %v281
      %v303 = vunpack.c.l.b16 %v282
      %v304 = vunpack.c.h.b16 %v282
      %v305 = vunpack.c.l.b16 %v283
      %v306 = vunpack.c.h.b16 %v283
      %v307 = vunpack.c.l.b16 %v284
      %v308 = vunpack.c.h.b16 %v284
      %v309 = vpack.c.b16 %v295, %v293
      %v310 = vpack.c.b16 %v296, %v294
      %v311 = vpack.c.b16 %v299, %v297
      %v312 = vpack.c.b16 %v300, %v298
      %v313 = vpack.c.b16 %v303, %v301
      %v314 = vpack.c.b16 %v304, %v302
      %v315 = vpack.c.b16 %v307, %v305
      %v316 = vpack.c.b16 %v308, %v306
      %vm325 = vcmask 523264
      %v327 = vsel %vm325, %v276, 0
      %329 = vmatprep.subr.bf16.mxu0 %v310
      %330 = vmatpush1.bf16.msra.mxu0 %v309
      %331 = vmatprep.subr.bf16.mxu0 %v312
      %332 = vmatpush1.bf16.msra.mxu0 %v311
      %333 = vmatprep.subr.bf16.mxu0 %v314
      %334 = vmatpush1.bf16.msra.mxu0 %v313
      %335 = vmatprep.subr.bf16.mxu0 %v316
      %336 = vmatpush1.bf16.msra.mxu0 %v315
      %337 = vmatprep.subr.bf16.mxu0 0
      %338 = vmatpush1.bf16.msra.mxu0 0
      %339 = vmatprep.subr.bf16.mxu0 0
      %340 = vmatpush1.bf16.msra.mxu0 0
      %341 = vmatprep.subr.bf16.mxu0 0
      %342 = vmatpush1.bf16.msra.mxu0 0
      %343 = vmatprep.subr.bf16.mxu0 0
      %344 = vmatpush1.bf16.msra.mxu0 0
      %345 = vmatprep.subr.bf16.mxu0 0
      %346 = vmatpush1.bf16.msra.mxu0 0
      %347 = vmatprep.subr.bf16.mxu0 0
      %348 = vmatpush1.bf16.msra.mxu0 0
      %349 = vmatprep.subr.bf16.mxu0 0
      %350 = vmatpush1.bf16.msra.mxu0 0
      %351 = vmatprep.subr.bf16.mxu0 0
      %352 = vmatpush1.bf16.msra.mxu0 0
      %353 = vmatprep.subr.bf16.mxu0 0
      %354 = vmatpush1.bf16.msra.mxu0 0
      %355 = vmatprep.subr.bf16.mxu0 0
      %356 = vmatpush1.bf16.msra.mxu0 0
      %357 = vmatprep.subr.bf16.mxu0 0
      %358 = vmatpush1.bf16.msra.mxu0 0
      %359 = vmatprep.subr.bf16.mxu0 0
      %360 = vmatpush1.bf16.msra.mxu0 0
      %361 = vmatprep.mubr.bf16.mxu0 0
      %362 = vmatmul.mubr.bf16.gmra.mrb[0].mxu0 %v327
      %v363 = vpop.f32.mrb[0].mxu0
      %v364 = vadd.f32 0.0, %v363
      %v365 = vpop.f32.mrb[0].mxu0
      %v366 = vadd.f32 0.0, %v365
      %v367 = vpop.f32.mrb[0].mxu0
      %v368 = vpop.f32.mrb[0].mxu0
      %369 = vdwg.mxu0
      %370 = vst [vmem:[#allocation2] sm:$0xff] %v364
      %371 = vst.msk [vmem:[#allocation2 + $0x8] sm:$0xff] %vm325, %v366
      %v372 = vlaneseq
      %v373 = vshrl.u32 %v372, 7
      %v374 = vlaneseq
      %v375 = vand.u32 %v374, 127
      %vm376 = vcmp.le.s32.totalorder %v375, %v373
      %v377 = vld [vmem:[#allocation2] sm:$0xff]
      %v378 = vld [vmem:[#allocation2 + $0x8] sm:$0xff]
      %v379 = vpack.c.bf16 %v377, %v377
      %381 = vrot.lane.b32.xlu0 %v379, 64
      %v382 = vpop.permute.xlu0 %381
      %vm383 = vcmask 130048
      %v385 = vsel %vm383, %v379, 0
      %v388 = vsel %vm383, %v382, 0
      %390 = vmatprep.subr.bf16.mxu0 0
      %391 = vmatpush1.bf16.xpose.msra.mxu0 %v388
      %392 = vmatprep.subr.bf16.mxu0 0
      %393 = vmatpush1.bf16.xpose.msra.mxu0 0
      %394 = vmatprep.subr.bf16.mxu0 0
      %395 = vmatpush1.bf16.xpose.msra.mxu0 0
      %396 = vmatprep.subr.bf16.mxu0 0
      %397 = vmatpush1.bf16.xpose.msra.mxu0 0
      %398 = vmatprep.subr.bf16.mxu0 0
      %399 = vmatpush1.bf16.xpose.msra.mxu0 0
      %400 = vmatprep.subr.bf16.mxu0 0
      %401 = vmatpush1.bf16.xpose.msra.mxu0 0
      %402 = vmatprep.subr.bf16.mxu0 0
      %403 = vmatpush1.bf16.xpose.msra.mxu0 0
      %404 = vmatprep.subr.bf16.mxu0 0
      %405 = vmatpush1.bf16.xpose.msra.mxu0 0
      %406 = vmatprep.subr.bf16.mxu0 0
      %407 = vmatpush1.bf16.xpose.msra.mxu0 0
      %408 = vmatprep.subr.bf16.mxu0 0
      %409 = vmatpush1.bf16.xpose.msra.mxu0 0
      %410 = vmatprep.subr.bf16.mxu0 0
      %411 = vmatpush1.bf16.xpose.msra.mxu0 0
      %412 = vmatprep.subr.bf16.mxu0 0
      %413 = vmatpush1.bf16.xpose.msra.mxu0 0
      %414 = vmatprep.subr.bf16.mxu0 0
      %415 = vmatpush1.bf16.xpose.msra.mxu0 0
      %416 = vmatprep.subr.bf16.mxu0 0
      %417 = vmatpush1.bf16.xpose.msra.mxu0 0
      %418 = vmatprep.subr.bf16.mxu0 0
      %419 = vmatpush1.bf16.xpose.msra.mxu0 0
      %420 = vmatprep.subr.bf16.mxu0 0
      %421 = vmatpush1.bf16.xpose.msra.mxu0 0
      %422 = vmatprep.mubr.bf16.mxu0 0
      %423 = vmatmul.mubr.bf16.gmra.mrb[0].mxu0 %v385
      %v424 = vpop.f32.mrb[0].mxu0
      %v425 = vadd.f32 0.0, %v424
      %v426 = vpop.f32.mrb[0].mxu0
      %v427 = vpop.f32.mrb[0].mxu0
      %v428 = vpop.f32.mrb[0].mxu0
      %429 = vdwg.mxu0
      %v430 = vmul.f32 %v425, 0.25
      %v431 = vld [vmem:[%s2] sm:$0xf]
      %v432 = vld [vmem:[%s2 + $0x4] sm:$0xf]
      %v435 = vunpack.c.l.b16 %v431
      %v436 = vunpack.c.l.b16 %v432
      %v437 = vpack.c.b16 %v436, %v435
      %439 = vmatprep.subr.bf16.mxu0 0
      %440 = vmatpush1.bf16.msra.mxu0 %v437
      %441 = vmatprep.subr.bf16.mxu0 0
      %442 = vmatpush1.bf16.msra.mxu0 0
      %443 = vmatprep.subr.bf16.mxu0 0
      %444 = vmatpush1.bf16.msra.mxu0 0
      %445 = vmatprep.subr.bf16.mxu0 0
      %446 = vmatpush1.bf16.msra.mxu0 0
      %447 = vmatprep.subr.bf16.mxu0 0
      %448 = vmatpush1.bf16.msra.mxu0 0
      %449 = vmatprep.subr.bf16.mxu0 0
      %450 = vmatpush1.bf16.msra.mxu0 0
      %451 = vmatprep.subr.bf16.mxu0 0
      %452 = vmatpush1.bf16.msra.mxu0 0
      %453 = vmatprep.subr.bf16.mxu0 0
      %454 = vmatpush1.bf16.msra.mxu0 0
      %455 = vmatprep.subr.bf16.mxu0 0
      %456 = vmatpush1.bf16.msra.mxu0 0
      %457 = vmatprep.subr.bf16.mxu0 0
      %458 = vmatpush1.bf16.msra.mxu0 0
      %459 = vmatprep.subr.bf16.mxu0 0
      %460 = vmatpush1.bf16.msra.mxu0 0
      %461 = vmatprep.subr.bf16.mxu0 0
      %462 = vmatpush1.bf16.msra.mxu0 0
      %463 = vmatprep.subr.bf16.mxu0 0
      %464 = vmatpush1.bf16.msra.mxu0 0
      %465 = vmatprep.subr.bf16.mxu0 0
      %466 = vmatpush1.bf16.msra.mxu0 0
      %467 = vmatprep.subr.bf16.mxu0 0
      %468 = vmatpush1.bf16.msra.mxu0 0
      %469 = vmatprep.subr.bf16.mxu0 0
      %470 = vmatpush1.bf16.msra.mxu0 0
      %471 = vmatprep.mubr.bf16.mxu0 0
      %472 = vmatmul.mubr.bf16.gmra.mrb[0].mxu0 %v385
      %v473 = vpop.f32.mrb[0].mxu0
      %v474 = vadd.f32 0.0, %v473
      %v475 = vpop.f32.mrb[0].mxu0
      %v476 = vpop.f32.mrb[0].mxu0
      %v477 = vpop.f32.mrb[0].mxu0
      %478 = vdwg.mxu0
      %479 = vst [vmem:[#allocation3] sm:$0xff] %v474
      %v480 = vld [vmem:[#allocation3] sm:$0x1]
      %482 = vrot.lane.b32.xlu0 %v480, 79
      %v483 = vpop.permute.xlu0 %482
      %vm485 = vcmask 57344
      %486 = vst.msk [vmem:[#allocation4] sm:$0x1] %vm485, %v483
      %v487 = vld [vmem:[#allocation3 + $0x1] sm:$0x1]
      %489 = vrot.lane.b32.xlu0 %v487, 80
      %v490 = vpop.permute.xlu0 %489
      %492 = vst.msk [vmem:[#allocation4 + $0x1] sm:$0x1] %vm485, %v490
      %v493 = vld [vmem:[#allocation3 + $0x2] sm:$0x1]
      %495 = vrot.lane.b32.xlu0 %v493, 81
      %v496 = vpop.permute.xlu0 %495
      %498 = vst.msk [vmem:[#allocation4 + $0x2] sm:$0x1] %vm485, %v496
      %v499 = vld [vmem:[#allocation3 + $0x3] sm:$0x1]
      %501 = vrot.lane.b32.xlu0 %v499, 82
      %v502 = vpop.permute.xlu0 %501
      %504 = vst.msk [vmem:[#allocation4 + $0x3] sm:$0x1] %vm485, %v502
      %v505 = vld [vmem:[#allocation3 + $0x4] sm:$0x1]
      %507 = vrot.lane.b32.xlu0 %v505, 83
      %v508 = vpop.permute.xlu0 %507
      %510 = vst.msk [vmem:[#allocation4 + $0x4] sm:$0x1] %vm485, %v508
      %v511 = vld [vmem:[#allocation3 + $0x5] sm:$0x1]
      %513 = vrot.lane.b32.xlu0 %v511, 84
      %v514 = vpop.permute.xlu0 %513
      %516 = vst.msk [vmem:[#allocation4 + $0x5] sm:$0x1] %vm485, %v514
      %v517 = vld [vmem:[#allocation3 + $0x6] sm:$0x1]
      %519 = vrot.lane.b32.xlu0 %v517, 85
      %v520 = vpop.permute.xlu0 %519
      %522 = vst.msk [vmem:[#allocation4 + $0x6] sm:$0x1] %vm485, %v520
      %v523 = vld [vmem:[#allocation3 + $0x7] sm:$0x1]
      %525 = vrot.lane.b32.xlu0 %v523, 86
      %v526 = vpop.permute.xlu0 %525
      %528 = vst.msk [vmem:[#allocation4 + $0x7] sm:$0x1] %vm485, %v526
      %v529 = vld [vmem:[#allocation4] sm:$0xff]
      %v530 = vadd.f32 %v430, %v529
      %v531 = vsel %vm376, %v530, -1e+30
      %vm532 = vcmask 64512
      %v533 = vsel %vm532, %v531, -inf
      %534 = vmax.xlane.f32.xlu0 %v533
      %v535 = vpop.xlane.xlu0 %534
      %v536 = vsub.f32 %v531, %v535
      %v537 = vmul.f32 %v536, 1.442695
      %v538 = vpow.pop %v537
      %v539 = vsel %vm532, %v538, 0.0
      %540 = vadd.xlane.f32.xlu0 %v539
      %v541 = vpop.xlane.xlu0 %540
      %v542 = vrcp.pop %v541
      %v543 = vmul.f32 %v538, %v542
      %v544 = vpack.c.bf16 %v543, %v543
      %v545 = vpack.c.bf16 %v378, %v378
      %v547 = vsel %vm532, %v544, 0
      %vm549 = vcmask 1043456
      %v551 = vsel %vm549, %v545, 0
      %553 = vmatprep.subr.bf16.mxu0 0
      %554 = vmatpush1.bf16.msra.mxu0 %v551
      %555 = vmatprep.subr.bf16.mxu0 0
      %556 = vmatpush1.bf16.msra.mxu0 0
      %557 = vmatprep.subr.bf16.mxu0 0
      %558 = vmatpush1.bf16.msra.mxu0 0
      %559 = vmatprep.subr.bf16.mxu0 0
      %560 = vmatpush1.bf16.msra.mxu0 0
      %561 = vmatprep.subr.bf16.mxu0 0
      %562 = vmatpush1.bf16.msra.mxu0 0
      %563 = vmatprep.subr.bf16.mxu0 0
      %564 = vmatpush1.bf16.msra.mxu0 0
      %565 = vmatprep.subr.bf16.mxu0 0
      %566 = vmatpush1.bf16.msra.mxu0 0
      %567 = vmatprep.subr.bf16.mxu0 0
      %568 = vmatpush1.bf16.msra.mxu0 0
      %569 = vmatprep.subr.bf16.mxu0 0
      %570 = vmatpush1.bf16.msra.mxu0 0
      %571 = vmatprep.subr.bf16.mxu0 0
      %572 = vmatpush1.bf16.msra.mxu0 0
      %573 = vmatprep.subr.bf16.mxu0 0
      %574 = vmatpush1.bf16.msra.mxu0 0
      %575 = vmatprep.subr.bf16.mxu0 0
      %576 = vmatpush1.bf16.msra.mxu0 0
      %577 = vmatprep.subr.bf16.mxu0 0
      %578 = vmatpush1.bf16.msra.mxu0 0
      %579 = vmatprep.subr.bf16.mxu0 0
      %580 = vmatpush1.bf16.msra.mxu0 0
      %581 = vmatprep.subr.bf16.mxu0 0
      %582 = vmatpush1.bf16.msra.mxu0 0
      %583 = vmatprep.subr.bf16.mxu0 0
      %584 = vmatpush1.bf16.msra.mxu0 0
      %585 = vmatprep.mubr.bf16.mxu0 0
      %586 = vmatmul.mubr.bf16.gmra.mrb[0].mxu0 %v547
      %v587 = vpop.f32.mrb[0].mxu0
      %v588 = vadd.f32 0.0, %v587
      %v589 = vpop.f32.mrb[0].mxu0
      %v590 = vpop.f32.mrb[0].mxu0
      %v591 = vpop.f32.mrb[0].mxu0
      %592 = vdwg.mxu0
      %593 = vst.msk [vmem:[#allocation5] sm:$0xff] %vm383, %v588
      %v594 = vld [vmem:[#allocation2] sm:$0xff]
      %v595 = vld [vmem:[#allocation2 + $0x8] sm:$0xff]
      %v596 = vpack.c.bf16 %v594, %v594
      %598 = vrot.lane.b32.xlu0 %v596, 112
      %v599 = vpop.permute.xlu0 %598
      %600 = vrot.lane.b32.xlu0 %v596, 48
      %v601 = vpop.permute.xlu0 %600
      %v603 = vsel %vm383, %v599, 0
      %v606 = vsel %vm383, %v601, 0
      %608 = vmatprep.subr.bf16.mxu0 0
      %609 = vmatpush1.bf16.xpose.msra.mxu0 %v606
      %610 = vmatprep.subr.bf16.mxu0 0
      %611 = vmatpush1.bf16.xpose.msra.mxu0 0
      %612 = vmatprep.subr.bf16.mxu0 0
      %613 = vmatpush1.bf16.xpose.msra.mxu0 0
      %614 = vmatprep.subr.bf16.mxu0 0
      %615 = vmatpush1.bf16.xpose.msra.mxu0 0
      %616 = vmatprep.subr.bf16.mxu0 0
      %617 = vmatpush1.bf16.xpose.msra.mxu0 0
      %618 = vmatprep.subr.bf16.mxu0 0
      %619 = vmatpush1.bf16.xpose.msra.mxu0 0
      %620 = vmatprep.subr.bf16.mxu0 0
      %621 = vmatpush1.bf16.xpose.msra.mxu0 0
      %622 = vmatprep.subr.bf16.mxu0 0
      %623 = vmatpush1.bf16.xpose.msra.mxu0 0
      %624 = vmatprep.subr.bf16.mxu0 0
      %625 = vmatpush1.bf16.xpose.msra.mxu0 0
      %626 = vmatprep.subr.bf16.mxu0 0
      %627 = vmatpush1.bf16.xpose.msra.mxu0 0
      %628 = vmatprep.subr.bf16.mxu0 0
      %629 = vmatpush1.bf16.xpose.msra.mxu0 0
      %630 = vmatprep.subr.bf16.mxu0 0
      %631 = vmatpush1.bf16.xpose.msra.mxu0 0
      %632 = vmatprep.subr.bf16.mxu0 0
      %633 = vmatpush1.bf16.xpose.msra.mxu0 0
      %634 = vmatprep.subr.bf16.mxu0 0
      %635 = vmatpush1.bf16.xpose.msra.mxu0 0
      %636 = vmatprep.subr.bf16.mxu0 0
      %637 = vmatpush1.bf16.xpose.msra.mxu0 0
      %638 = vmatprep.subr.bf16.mxu0 0
      %639 = vmatpush1.bf16.xpose.msra.mxu0 0
      %640 = vmatprep.mubr.bf16.mxu0 0
      %641 = vmatmul.mubr.bf16.gmra.mrb[0].mxu0 %v603
      %v642 = vpop.f32.mrb[0].mxu0
      %v643 = vadd.f32 0.0, %v642
      %v644 = vpop.f32.mrb[0].mxu0
      %v645 = vpop.f32.mrb[0].mxu0
      %v646 = vpop.f32.mrb[0].mxu0
      %647 = vdwg.mxu0
      %v648 = vmul.f32 %v643, 0.25
      %s649 = scalar_lea.vmem %s2, 8
      %v650 = vld [vmem:[%s649] sm:$0xf]
      %v651 = vld [vmem:[%s649 + $0x4] sm:$0xf]
      %v654 = vunpack.c.l.b16 %v650
      %v655 = vunpack.c.l.b16 %v651
      %v656 = vpack.c.b16 %v655, %v654
      %658 = vmatprep.subr.bf16.mxu0 0
      %659 = vmatpush1.bf16.msra.mxu0 %v656
      %660 = vmatprep.subr.bf16.mxu0 0
      %661 = vmatpush1.bf16.msra.mxu0 0
      %662 = vmatprep.subr.bf16.mxu0 0
      %663 = vmatpush1.bf16.msra.mxu0 0
      %664 = vmatprep.subr.bf16.mxu0 0
      %665 = vmatpush1.bf16.msra.mxu0 0
      %666 = vmatprep.subr.bf16.mxu0 0
      %667 = vmatpush1.bf16.msra.mxu0 0
      %668 = vmatprep.subr.bf16.mxu0 0
      %669 = vmatpush1.bf16.msra.mxu0 0
      %670 = vmatprep.subr.bf16.mxu0 0
      %671 = vmatpush1.bf16.msra.mxu0 0
      %672 = vmatprep.subr.bf16.mxu0 0
      %673 = vmatpush1.bf16.msra.mxu0 0
      %674 = vmatprep.subr.bf16.mxu0 0
      %675 = vmatpush1.bf16.msra.mxu0 0
      %676 = vmatprep.subr.bf16.mxu0 0
      %677 = vmatpush1.bf16.msra.mxu0 0
      %678 = vmatprep.subr.bf16.mxu0 0
      %679 = vmatpush1.bf16.msra.mxu0 0
      %680 = vmatprep.subr.bf16.mxu0 0
      %681 = vmatpush1.bf16.msra.mxu0 0
      %682 = vmatprep.subr.bf16.mxu0 0
      %683 = vmatpush1.bf16.msra.mxu0 0
      %684 = vmatprep.subr.bf16.mxu0 0
      %685 = vmatpush1.bf16.msra.mxu0 0
      %686 = vmatprep.subr.bf16.mxu0 0
      %687 = vmatpush1.bf16.msra.mxu0 0
      %688 = vmatprep.subr.bf16.mxu0 0
      %689 = vmatpush1.bf16.msra.mxu0 0
      %690 = vmatprep.mubr.bf16.mxu0 0
      %691 = vmatmul.mubr.bf16.gmra.mrb[0].mxu0 %v603
      %v692 = vpop.f32.mrb[0].mxu0
      %v693 = vadd.f32 0.0, %v692
      %v694 = vpop.f32.mrb[0].mxu0
      %v695 = vpop.f32.mrb[0].mxu0
      %v696 = vpop.f32.mrb[0].mxu0
      %697 = vdwg.mxu0
      %698 = vst [vmem:[#allocation3] sm:$0xff] %v693
      %v699 = vld [vmem:[#allocation3] sm:$0x1]
      %701 = vrot.lane.b32.xlu0 %v699, 79
      %v702 = vpop.permute.xlu0 %701
      %704 = vst.msk [vmem:[#allocation4] sm:$0x1] %vm485, %v702
      %v705 = vld [vmem:[#allocation3 + $0x1] sm:$0x1]
      %707 = vrot.lane.b32.xlu0 %v705, 80
      %v708 = vpop.permute.xlu0 %707
      %710 = vst.msk [vmem:[#allocation4 + $0x1] sm:$0x1] %vm485, %v708
      %v711 = vld [vmem:[#allocation3 + $0x2] sm:$0x1]
      %713 = vrot.lane.b32.xlu0 %v711, 81
      %v714 = vpop.permute.xlu0 %713
      %716 = vst.msk [vmem:[#allocation4 + $0x2] sm:$0x1] %vm485, %v714
      %v717 = vld [vmem:[#allocation3 + $0x3] sm:$0x1]
      %719 = vrot.lane.b32.xlu0 %v717, 82
      %v720 = vpop.permute.xlu0 %719
      %722 = vst.msk [vmem:[#allocation4 + $0x3] sm:$0x1] %vm485, %v720
      %v723 = vld [vmem:[#allocation3 + $0x4] sm:$0x1]
      %725 = vrot.lane.b32.xlu0 %v723, 83
      %v726 = vpop.permute.xlu0 %725
      %728 = vst.msk [vmem:[#allocation4 + $0x4] sm:$0x1] %vm485, %v726
      %v729 = vld [vmem:[#allocation3 + $0x5] sm:$0x1]
      %731 = vrot.lane.b32.xlu0 %v729, 84
      %v732 = vpop.permute.xlu0 %731
      %734 = vst.msk [vmem:[#allocation4 + $0x5] sm:$0x1] %vm485, %v732
      %v735 = vld [vmem:[#allocation3 + $0x6] sm:$0x1]
      %737 = vrot.lane.b32.xlu0 %v735, 85
      %v738 = vpop.permute.xlu0 %737
      %740 = vst.msk [vmem:[#allocation4 + $0x6] sm:$0x1] %vm485, %v738
      %v741 = vld [vmem:[#allocation3 + $0x7] sm:$0x1]
      %743 = vrot.lane.b32.xlu0 %v741, 86
      %v744 = vpop.permute.xlu0 %743
      %746 = vst.msk [vmem:[#allocation4 + $0x7] sm:$0x1] %vm485, %v744
      %v747 = vld [vmem:[#allocation4] sm:$0xff]
      %v748 = vadd.f32 %v648, %v747
      %v749 = vsel %vm376, %v748, -1e+30
      %v750 = vsel %vm532, %v749, -inf
      %751 = vmax.xlane.f32.xlu0 %v750
      %v752 = vpop.xlane.xlu0 %751
      %v753 = vsub.f32 %v749, %v752
      %v754 = vmul.f32 %v753, 1.442695
      %v755 = vpow.pop %v754
      %v756 = vsel %vm532, %v755, 0.0
      %757 = vadd.xlane.f32.xlu0 %v756
      %v758 = vpop.xlane.xlu0 %757
      %v759 = vrcp.pop %v758
      %v760 = vmul.f32 %v755, %v759
      %v761 = vpack.c.bf16 %v760, %v760
      %v762 = vpack.c.bf16 %v595, %v595
      %764 = vrot.lane.b32.xlu0 %v762, 112
      %v765 = vpop.permute.xlu0 %764
      %v767 = vsel %vm532, %v761, 0
      %v770 = vsel %vm549, %v765, 0
      %772 = vmatprep.subr.bf16.mxu0 0
      %773 = vmatpush1.bf16.msra.mxu0 %v770
      %774 = vmatprep.subr.bf16.mxu0 0
      %775 = vmatpush1.bf16.msra.mxu0 0
      %776 = vmatprep.subr.bf16.mxu0 0
      %777 = vmatpush1.bf16.msra.mxu0 0
      %778 = vmatprep.subr.bf16.mxu0 0
      %779 = vmatpush1.bf16.msra.mxu0 0
      %780 = vmatprep.subr.bf16.mxu0 0
      %781 = vmatpush1.bf16.msra.mxu0 0
      %782 = vmatprep.subr.bf16.mxu0 0
      %783 = vmatpush1.bf16.msra.mxu0 0
      %784 = vmatprep.subr.bf16.mxu0 0
      %785 = vmatpush1.bf16.msra.mxu0 0
      %786 = vmatprep.subr.bf16.mxu0 0
      %787 = vmatpush1.bf16.msra.mxu0 0
      %788 = vmatprep.subr.bf16.mxu0 0
      %789 = vmatpush1.bf16.msra.mxu0 0
      %790 = vmatprep.subr.bf16.mxu0 0
      %791 = vmatpush1.bf16.msra.mxu0 0
      %792 = vmatprep.subr.bf16.mxu0 0
      %793 = vmatpush1.bf16.msra.mxu0 0
      %794 = vmatprep.subr.bf16.mxu0 0
      %795 = vmatpush1.bf16.msra.mxu0 0
      %796 = vmatprep.subr.bf16.mxu0 0
      %797 = vmatpush1.bf16.msra.mxu0 0
      %798 = vmatprep.subr.bf16.mxu0 0
      %799 = vmatpush1.bf16.msra.mxu0 0
      %800 = vmatprep.subr.bf16.mxu0 0
      %801 = vmatpush1.bf16.msra.mxu0 0
      %802 = vmatprep.subr.bf16.mxu0 0
      %803 = vmatpush1.bf16.msra.mxu0 0
      %804 = vmatprep.mubr.bf16.mxu0 0
      %805 = vmatmul.mubr.bf16.gmra.mrb[0].mxu0 %v767
      %v806 = vpop.f32.mrb[0].mxu0
      %v807 = vadd.f32 0.0, %v806
      %v808 = vpop.f32.mrb[0].mxu0
      %v809 = vpop.f32.mrb[0].mxu0
      %v810 = vpop.f32.mrb[0].mxu0
      %811 = vdwg.mxu0
      %813 = vrot.lane.b32.xlu0 %v807, 16
      %v814 = vpop.permute.xlu0 %813
      %vm816 = vcmask 261248
      %817 = vst.msk [vmem:[#allocation5] sm:$0xff] %vm816, %v814
      %v818 = vld [vmem:[#allocation2] sm:$0xff]
      %v819 = vld [vmem:[#allocation2 + $0x8] sm:$0xff]
      %v820 = vpack.c.bf16 %v818, %v818
      %822 = vrot.lane.b32.xlu0 %v820, 96
      %v823 = vpop.permute.xlu0 %822
      %824 = vrot.lane.b32.xlu0 %v820, 32
      %v825 = vpop.permute.xlu0 %824
      %v827 = vsel %vm383, %v823, 0
      %v830 = vsel %vm383, %v825, 0
      %832 = vmatprep.subr.bf16.mxu0 0
      %833 = vmatpush1.bf16.xpose.msra.mxu0 %v830
      %834 = vmatprep.subr.bf16.mxu0 0
      %835 = vmatpush1.bf16.xpose.msra.mxu0 0
      %836 = vmatprep.subr.bf16.mxu0 0
      %837 = vmatpush1.bf16.xpose.msra.mxu0 0
      %838 = vmatprep.subr.bf16.mxu0 0
      %839 = vmatpush1.bf16.xpose.msra.mxu0 0
      %840 = vmatprep.subr.bf16.mxu0 0
      %841 = vmatpush1.bf16.xpose.msra.mxu0 0
      %842 = vmatprep.subr.bf16.mxu0 0
      %843 = vmatpush1.bf16.xpose.msra.mxu0 0
      %844 = vmatprep.subr.bf16.mxu0 0
      %845 = vmatpush1.bf16.xpose.msra.mxu0 0
      %846 = vmatprep.subr.bf16.mxu0 0
      %847 = vmatpush1.bf16.xpose.msra.mxu0 0
      %848 = vmatprep.subr.bf16.mxu0 0
      %849 = vmatpush1.bf16.xpose.msra.mxu0 0
      %850 = vmatprep.subr.bf16.mxu0 0
      %851 = vmatpush1.bf16.xpose.msra.mxu0 0
      %852 = vmatprep.subr.bf16.mxu0 0
      %853 = vmatpush1.bf16.xpose.msra.mxu0 0
      %854 = vmatprep.subr.bf16.mxu0 0
      %855 = vmatpush1.bf16.xpose.msra.mxu0 0
      %856 = vmatprep.subr.bf16.mxu0 0
      %857 = vmatpush1.bf16.xpose.msra.mxu0 0
      %858 = vmatprep.subr.bf16.mxu0 0
      %859 = vmatpush1.bf16.xpose.msra.mxu0 0
      %860 = vmatprep.subr.bf16.mxu0 0
      %861 = vmatpush1.bf16.xpose.msra.mxu0 0
      %862 = vmatprep.subr.bf16.mxu0 0
      %863 = vmatpush1.bf16.xpose.msra.mxu0 0
      %864 = vmatprep.mubr.bf16.mxu0 0
      %865 = vmatmul.mubr.bf16.gmra.mrb[0].mxu0 %v827
      %v866 = vpop.f32.mrb[0].mxu0
      %v867 = vadd.f32 0.0, %v866
      %v868 = vpop.f32.mrb[0].mxu0
      %v869 = vpop.f32.mrb[0].mxu0
      %v870 = vpop.f32.mrb[0].mxu0
      %871 = vdwg.mxu0
      %v872 = vmul.f32 %v867, 0.25
      %s873 = scalar_lea.vmem %s2, 16
      %v874 = vld [vmem:[%s873] sm:$0xf]
      %v875 = vld [vmem:[%s873 + $0x4] sm:$0xf]
      %v878 = vunpack.c.l.b16 %v874
      %v879 = vunpack.c.l.b16 %v875
      %v880 = vpack.c.b16 %v879, %v878
      %882 = vmatprep.subr.bf16.mxu0 0
      %883 = vmatpush1.bf16.msra.mxu0 %v880
      %884 = vmatprep.subr.bf16.mxu0 0
      %885 = vmatpush1.bf16.msra.mxu0 0
      %886 = vmatprep.subr.bf16.mxu0 0
      %887 = vmatpush1.bf16.msra.mxu0 0
      %888 = vmatprep.subr.bf16.mxu0 0
      %889 = vmatpush1.bf16.msra.mxu0 0
      %890 = vmatprep.subr.bf16.mxu0 0
      %891 = vmatpush1.bf16.msra.mxu0 0
      %892 = vmatprep.subr.bf16.mxu0 0
      %893 = vmatpush1.bf16.msra.mxu0 0
      %894 = vmatprep.subr.bf16.mxu0 0
      %895 = vmatpush1.bf16.msra.mxu0 0
      %896 = vmatprep.subr.bf16.mxu0 0
      %897 = vmatpush1.bf16.msra.mxu0 0
      %898 = vmatprep.subr.bf16.mxu0 0
      %899 = vmatpush1.bf16.msra.mxu0 0
      %900 = vmatprep.subr.bf16.mxu0 0
      %901 = vmatpush1.bf16.msra.mxu0 0
      %902 = vmatprep.subr.bf16.mxu0 0
      %903 = vmatpush1.bf16.msra.mxu0 0
      %904 = vmatprep.subr.bf16.mxu0 0
      %905 = vmatpush1.bf16.msra.mxu0 0
      %906 = vmatprep.subr.bf16.mxu0 0
      %907 = vmatpush1.bf16.msra.mxu0 0
      %908 = vmatprep.subr.bf16.mxu0 0
      %909 = vmatpush1.bf16.msra.mxu0 0
      %910 = vmatprep.subr.bf16.mxu0 0
      %911 = vmatpush1.bf16.msra.mxu0 0
      %912 = vmatprep.subr.bf16.mxu0 0
      %913 = vmatpush1.bf16.msra.mxu0 0
      %914 = vmatprep.mubr.bf16.mxu0 0
      %915 = vmatmul.mubr.bf16.gmra.mrb[0].mxu0 %v827
      %v916 = vpop.f32.mrb[0].mxu0
      %v917 = vadd.f32 0.0, %v916
      %v918 = vpop.f32.mrb[0].mxu0
      %v919 = vpop.f32.mrb[0].mxu0
      %v920 = vpop.f32.mrb[0].mxu0
      %921 = vdwg.mxu0
      %922 = vst [vmem:[#allocation3] sm:$0xff] %v917
      %v923 = vld [vmem:[#allocation3] sm:$0x1]
      %925 = vrot.lane.b32.xlu0 %v923, 79
      %v926 = vpop.permute.xlu0 %925
      %928 = vst.msk [vmem:[#allocation4] sm:$0x1] %vm485, %v926
      %v929 = vld [vmem:[#allocation3 + $0x1] sm:$0x1]
      %931 = vrot.lane.b32.xlu0 %v929, 80
      %v932 = vpop.permute.xlu0 %931
      %934 = vst.msk [vmem:[#allocation4 + $0x1] sm:$0x1] %vm485, %v932
      %v935 = vld [vmem:[#allocation3 + $0x2] sm:$0x1]
      %937 = vrot.lane.b32.xlu0 %v935, 81
      %v938 = vpop.permute.xlu0 %937
      %940 = vst.msk [vmem:[#allocation4 + $0x2] sm:$0x1] %vm485, %v938
      %v941 = vld [vmem:[#allocation3 + $0x3] sm:$0x1]
      %943 = vrot.lane.b32.xlu0 %v941, 82
      %v944 = vpop.permute.xlu0 %943
      %946 = vst.msk [vmem:[#allocation4 + $0x3] sm:$0x1] %vm485, %v944
      %v947 = vld [vmem:[#allocation3 + $0x4] sm:$0x1]
      %949 = vrot.lane.b32.xlu0 %v947, 83
      %v950 = vpop.permute.xlu0 %949
      %952 = vst.msk [vmem:[#allocation4 + $0x4] sm:$0x1] %vm485, %v950
      %v953 = vld [vmem:[#allocation3 + $0x5] sm:$0x1]
      %955 = vrot.lane.b32.xlu0 %v953, 84
      %v956 = vpop.permute.xlu0 %955
      %958 = vst.msk [vmem:[#allocation4 + $0x5] sm:$0x1] %vm485, %v956
      %v959 = vld [vmem:[#allocation3 + $0x6] sm:$0x1]
      %961 = vrot.lane.b32.xlu0 %v959, 85
      %v962 = vpop.permute.xlu0 %961
      %964 = vst.msk [vmem:[#allocation4 + $0x6] sm:$0x1] %vm485, %v962
      %v965 = vld [vmem:[#allocation3 + $0x7] sm:$0x1]
      %967 = vrot.lane.b32.xlu0 %v965, 86
      %v968 = vpop.permute.xlu0 %967
      %970 = vst.msk [vmem:[#allocation4 + $0x7] sm:$0x1] %vm485, %v968
      %v971 = vld [vmem:[#allocation4] sm:$0xff]
      %v972 = vadd.f32 %v872, %v971
      %v973 = vsel %vm376, %v972, -1e+30
      %v974 = vsel %vm532, %v973, -inf
      %975 = vmax.xlane.f32.xlu0 %v974
      %v976 = vpop.xlane.xlu0 %975
      %v977 = vsub.f32 %v973, %v976
      %v978 = vmul.f32 %v977, 1.442695
      %v979 = vpow.pop %v978
      %v980 = vsel %vm532, %v979, 0.0
      %981 = vadd.xlane.f32.xlu0 %v980
      %v982 = vpop.xlane.xlu0 %981
      %v983 = vrcp.pop %v982
      %v984 = vmul.f32 %v979, %v983
      %v985 = vpack.c.bf16 %v984, %v984
      %v986 = vpack.c.bf16 %v819, %v819
      %988 = vrot.lane.b32.xlu0 %v986, 96
      %v989 = vpop.permute.xlu0 %988
      %v991 = vsel %vm532, %v985, 0
      %v994 = vsel %vm549, %v989, 0
      %996 = vmatprep.subr.bf16.mxu0 0
      %997 = vmatpush1.bf16.msra.mxu0 %v994
      %998 = vmatprep.subr.bf16.mxu0 0
      %999 = vmatpush1.bf16.msra.mxu0 0
      %1000 = vmatprep.subr.bf16.mxu0 0
      %1001 = vmatpush1.bf16.msra.mxu0 0
      %1002 = vmatprep.subr.bf16.mxu0 0
      %1003 = vmatpush1.bf16.msra.mxu0 0
      %1004 = vmatprep.subr.bf16.mxu0 0
      %1005 = vmatpush1.bf16.msra.mxu0 0
      %1006 = vmatprep.subr.bf16.mxu0 0
      %1007 = vmatpush1.bf16.msra.mxu0 0
      %1008 = vmatprep.subr.bf16.mxu0 0
      %1009 = vmatpush1.bf16.msra.mxu0 0
      %1010 = vmatprep.subr.bf16.mxu0 0
      %1011 = vmatpush1.bf16.msra.mxu0 0
      %1012 = vmatprep.subr.bf16.mxu0 0
      %1013 = vmatpush1.bf16.msra.mxu0 0
      %1014 = vmatprep.subr.bf16.mxu0 0
      %1015 = vmatpush1.bf16.msra.mxu0 0
      %1016 = vmatprep.subr.bf16.mxu0 0
      %1017 = vmatpush1.bf16.msra.mxu0 0
      %1018 = vmatprep.subr.bf16.mxu0 0
      %1019 = vmatpush1.bf16.msra.mxu0 0
      %1020 = vmatprep.subr.bf16.mxu0 0
      %1021 = vmatpush1.bf16.msra.mxu0 0
      %1022 = vmatprep.subr.bf16.mxu0 0
      %1023 = vmatpush1.bf16.msra.mxu0 0
      %1024 = vmatprep.subr.bf16.mxu0 0
      %1025 = vmatpush1.bf16.msra.mxu0 0
      %1026 = vmatprep.subr.bf16.mxu0 0
      %1027 = vmatpush1.bf16.msra.mxu0 0
      %1028 = vmatprep.mubr.bf16.mxu0 0
      %1029 = vmatmul.mubr.bf16.gmra.mrb[0].mxu0 %v991
      %v1030 = vpop.f32.mrb[0].mxu0
      %v1031 = vadd.f32 0.0, %v1030
      %v1032 = vpop.f32.mrb[0].mxu0
      %v1033 = vpop.f32.mrb[0].mxu0
      %v1034 = vpop.f32.mrb[0].mxu0
      %1035 = vdwg.mxu0
      %1037 = vrot.lane.b32.xlu0 %v1031, 32
      %v1038 = vpop.permute.xlu0 %1037
      %vm1040 = vcmask 392448
      %1041 = vst.msk [vmem:[#allocation5] sm:$0xff] %vm1040, %v1038
      %v1042 = vld [vmem:[#allocation2] sm:$0xff]
      %v1043 = vld [vmem:[#allocation2 + $0x8] sm:$0xff]
      %v1044 = vpack.c.bf16 %v1042, %v1042
      %1046 = vrot.lane.b32.xlu0 %v1044, 80
      %v1047 = vpop.permute.xlu0 %1046
      %1048 = vrot.lane.b32.xlu0 %v1044, 16
      %v1049 = vpop.permute.xlu0 %1048
      %v1051 = vsel %vm383, %v1047, 0
      %v1054 = vsel %vm383, %v1049, 0
      %1056 = vmatprep.subr.bf16.mxu0 0
      %1057 = vmatpush1.bf16.xpose.msra.mxu0 %v1054
      %1058 = vmatprep.subr.bf16.mxu0 0
      %1059 = vmatpush1.bf16.xpose.msra.mxu0 0
      %1060 = vmatprep.subr.bf16.mxu0 0
      %1061 = vmatpush1.bf16.xpose.msra.mxu0 0
      %1062 = vmatprep.subr.bf16.mxu0 0
      %1063 = vmatpush1.bf16.xpose.msra.mxu0 0
      %1064 = vmatprep.subr.bf16.mxu0 0
      %1065 = vmatpush1.bf16.xpose.msra.mxu0 0
      %1066 = vmatprep.subr.bf16.mxu0 0
      %1067 = vmatpush1.bf16.xpose.msra.mxu0 0
      %1068 = vmatprep.subr.bf16.mxu0 0
      %1069 = vmatpush1.bf16.xpose.msra.mxu0 0
      %1070 = vmatprep.subr.bf16.mxu0 0
      %1071 = vmatpush1.bf16.xpose.msra.mxu0 0
      %1072 = vmatprep.subr.bf16.mxu0 0
      %1073 = vmatpush1.bf16.xpose.msra.mxu0 0
      %1074 = vmatprep.subr.bf16.mxu0 0
      %1075 = vmatpush1.bf16.xpose.msra.mxu0 0
      %1076 = vmatprep.subr.bf16.mxu0 0
      %1077 = vmatpush1.bf16.xpose.msra.mxu0 0
      %1078 = vmatprep.subr.bf16.mxu0 0
      %1079 = vmatpush1.bf16.xpose.msra.mxu0 0
      %1080 = vmatprep.subr.bf16.mxu0 0
      %1081 = vmatpush1.bf16.xpose.msra.mxu0 0
      %1082 = vmatprep.subr.bf16.mxu0 0
      %1083 = vmatpush1.bf16.xpose.msra.mxu0 0
      %1084 = vmatprep.subr.bf16.mxu0 0
      %1085 = vmatpush1.bf16.xpose.msra.mxu0 0
      %1086 = vmatprep.subr.bf16.mxu0 0
      %1087 = vmatpush1.bf16.xpose.msra.mxu0 0
      %1088 = vmatprep.mubr.bf16.mxu0 0
      %1089 = vmatmul.mubr.bf16.gmra.mrb[0].mxu0 %v1051
      %v1090 = vpop.f32.mrb[0].mxu0
      %v1091 = vadd.f32 0.0, %v1090
      %v1092 = vpop.f32.mrb[0].mxu0
      %v1093 = vpop.f32.mrb[0].mxu0
      %v1094 = vpop.f32.mrb[0].mxu0
      %1095 = vdwg.mxu0
      %v1096 = vmul.f32 %v1091, 0.25
      %s1097 = scalar_lea.vmem %s2, 24
      %v1098 = vld [vmem:[%s1097] sm:$0xf]
      %v1099 = vld [vmem:[%s1097 + $0x4] sm:$0xf]
      %v1102 = vunpack.c.l.b16 %v1098
      %v1103 = vunpack.c.l.b16 %v1099
      %v1104 = vpack.c.b16 %v1103, %v1102
      %1106 = vmatprep.subr.bf16.mxu0 0
      %1107 = vmatpush1.bf16.msra.mxu0 %v1104
      %1108 = vmatprep.subr.bf16.mxu0 0
      %1109 = vmatpush1.bf16.msra.mxu0 0
      %1110 = vmatprep.subr.bf16.mxu0 0
      %1111 = vmatpush1.bf16.msra.mxu0 0
      %1112 = vmatprep.subr.bf16.mxu0 0
      %1113 = vmatpush1.bf16.msra.mxu0 0
      %1114 = vmatprep.subr.bf16.mxu0 0
      %1115 = vmatpush1.bf16.msra.mxu0 0
      %1116 = vmatprep.subr.bf16.mxu0 0
      %1117 = vmatpush1.bf16.msra.mxu0 0
      %1118 = vmatprep.subr.bf16.mxu0 0
      %1119 = vmatpush1.bf16.msra.mxu0 0
      %1120 = vmatprep.subr.bf16.mxu0 0
      %1121 = vmatpush1.bf16.msra.mxu0 0
      %1122 = vmatprep.subr.bf16.mxu0 0
      %1123 = vmatpush1.bf16.msra.mxu0 0
      %1124 = vmatprep.subr.bf16.mxu0 0
      %1125 = vmatpush1.bf16.msra.mxu0 0
      %1126 = vmatprep.subr.bf16.mxu0 0
      %1127 = vmatpush1.bf16.msra.mxu0 0
      %1128 = vmatprep.subr.bf16.mxu0 0
      %1129 = vmatpush1.bf16.msra.mxu0 0
      %1130 = vmatprep.subr.bf16.mxu0 0
      %1131 = vmatpush1.bf16.msra.mxu0 0
      %1132 = vmatprep.subr.bf16.mxu0 0
      %1133 = vmatpush1.bf16.msra.mxu0 0
      %1134 = vmatprep.subr.bf16.mxu0 0
      %1135 = vmatpush1.bf16.msra.mxu0 0
      %1136 = vmatprep.subr.bf16.mxu0 0
      %1137 = vmatpush1.bf16.msra.mxu0 0
      %1138 = vmatprep.mubr.bf16.mxu0 0
      %1139 = vmatmul.mubr.bf16.gmra.mrb[0].mxu0 %v1051
      %v1140 = vpop.f32.mrb[0].mxu0
      %v1141 = vadd.f32 0.0, %v1140
      %v1142 = vpop.f32.mrb[0].mxu0
      %v1143 = vpop.f32.mrb[0].mxu0
      %v1144 = vpop.f32.mrb[0].mxu0
      %1145 = vdwg.mxu0
      %1146 = vst [vmem:[#allocation3] sm:$0xff] %v1141
      %v1147 = vld [vmem:[#allocation3] sm:$0x1]
      %1149 = vrot.lane.b32.xlu0 %v1147, 79
      %v1150 = vpop.permute.xlu0 %1149
      %1152 = vst.msk [vmem:[#allocation4] sm:$0x1] %vm485, %v1150
      %v1153 = vld [vmem:[#allocation3 + $0x1] sm:$0x1]
      %1155 = vrot.lane.b32.xlu0 %v1153, 80
      %v1156 = vpop.permute.xlu0 %1155
      %1158 = vst.msk [vmem:[#allocation4 + $0x1] sm:$0x1] %vm485, %v1156
      %v1159 = vld [vmem:[#allocation3 + $0x2] sm:$0x1]
      %1161 = vrot.lane.b32.xlu0 %v1159, 81
      %v1162 = vpop.permute.xlu0 %1161
      %1164 = vst.msk [vmem:[#allocation4 + $0x2] sm:$0x1] %vm485, %v1162
      %v1165 = vld [vmem:[#allocation3 + $0x3] sm:$0x1]
      %1167 = vrot.lane.b32.xlu0 %v1165, 82
      %v1168 = vpop.permute.xlu0 %1167
      %1170 = vst.msk [vmem:[#allocation4 + $0x3] sm:$0x1] %vm485, %v1168
      %v1171 = vld [vmem:[#allocation3 + $0x4] sm:$0x1]
      %1173 = vrot.lane.b32.xlu0 %v1171, 83
      %v1174 = vpop.permute.xlu0 %1173
      %1176 = vst.msk [vmem:[#allocation4 + $0x4] sm:$0x1] %vm485, %v1174
      %v1177 = vld [vmem:[#allocation3 + $0x5] sm:$0x1]
      %1179 = vrot.lane.b32.xlu0 %v1177, 84
      %v1180 = vpop.permute.xlu0 %1179
      %1182 = vst.msk [vmem:[#allocation4 + $0x5] sm:$0x1] %vm485, %v1180
      %v1183 = vld [vmem:[#allocation3 + $0x6] sm:$0x1]
      %1185 = vrot.lane.b32.xlu0 %v1183, 85
      %v1186 = vpop.permute.xlu0 %1185
      %1188 = vst.msk [vmem:[#allocation4 + $0x6] sm:$0x1] %vm485, %v1186
      %v1189 = vld [vmem:[#allocation3 + $0x7] sm:$0x1]
      %1191 = vrot.lane.b32.xlu0 %v1189, 86
      %v1192 = vpop.permute.xlu0 %1191
      %1194 = vst.msk [vmem:[#allocation4 + $0x7] sm:$0x1] %vm485, %v1192
      %v1195 = vld [vmem:[#allocation4] sm:$0xff]
      %v1196 = vadd.f32 %v1096, %v1195
      %v1197 = vsel %vm376, %v1196, -1e+30
      %v1198 = vsel %vm532, %v1197, -inf
      %1199 = vmax.xlane.f32.xlu0 %v1198
      %v1200 = vpop.xlane.xlu0 %1199
      %v1201 = vsub.f32 %v1197, %v1200
      %v1202 = vmul.f32 %v1201, 1.442695
      %v1203 = vpow.pop %v1202
      %v1204 = vsel %vm532, %v1203, 0.0
      %1205 = vadd.xlane.f32.xlu0 %v1204
      %v1206 = vpop.xlane.xlu0 %1205
      %v1207 = vrcp.pop %v1206
      %v1208 = vmul.f32 %v1203, %v1207
      %v1209 = vpack.c.bf16 %v1208, %v1208
      %v1210 = vpack.c.bf16 %v1043, %v1043
      %1212 = vrot.lane.b32.xlu0 %v1210, 80
      %v1213 = vpop.permute.xlu0 %1212
      %v1215 = vsel %vm532, %v1209, 0
      %v1218 = vsel %vm549, %v1213, 0
      %1220 = vmatprep.subr.bf16.mxu0 0
      %1221 = vmatpush1.bf16.msra.mxu0 %v1218
      %1222 = vmatprep.subr.bf16.mxu0 0
      %1223 = vmatpush1.bf16.msra.mxu0 0
      %1224 = vmatprep.subr.bf16.mxu0 0
      %1225 = vmatpush1.bf16.msra.mxu0 0
      %1226 = vmatprep.subr.bf16.mxu0 0
      %1227 = vmatpush1.bf16.msra.mxu0 0
      %1228 = vmatprep.subr.bf16.mxu0 0
      %1229 = vmatpush1.bf16.msra.mxu0 0
      %1230 = vmatprep.subr.bf16.mxu0 0
      %1231 = vmatpush1.bf16.msra.mxu0 0
      %1232 = vmatprep.subr.bf16.mxu0 0
      %1233 = vmatpush1.bf16.msra.mxu0 0
      %1234 = vmatprep.subr.bf16.mxu0 0
      %1235 = vmatpush1.bf16.msra.mxu0 0
      %1236 = vmatprep.subr.bf16.mxu0 0
      %1237 = vmatpush1.bf16.msra.mxu0 0
      %1238 = vmatprep.subr.bf16.mxu0 0
      %1239 = vmatpush1.bf16.msra.mxu0 0
      %1240 = vmatprep.subr.bf16.mxu0 0
      %1241 = vmatpush1.bf16.msra.mxu0 0
      %1242 = vmatprep.subr.bf16.mxu0 0
      %1243 = vmatpush1.bf16.msra.mxu0 0
      %1244 = vmatprep.subr.bf16.mxu0 0
      %1245 = vmatpush1.bf16.msra.mxu0 0
      %1246 = vmatprep.subr.bf16.mxu0 0
      %1247 = vmatpush1.bf16.msra.mxu0 0
      %1248 = vmatprep.subr.bf16.mxu0 0
      %1249 = vmatpush1.bf16.msra.mxu0 0
      %1250 = vmatprep.subr.bf16.mxu0 0
      %1251 = vmatpush1.bf16.msra.mxu0 0
      %1252 = vmatprep.mubr.bf16.mxu0 0
      %1253 = vmatmul.mubr.bf16.gmra.mrb[0].mxu0 %v1215
      %v1254 = vpop.f32.mrb[0].mxu0
      %v1255 = vadd.f32 0.0, %v1254
      %v1256 = vpop.f32.mrb[0].mxu0
      %v1257 = vpop.f32.mrb[0].mxu0
      %v1258 = vpop.f32.mrb[0].mxu0
      %1259 = vdwg.mxu0
      %1261 = vrot.lane.b32.xlu0 %v1255, 48
      %v1262 = vpop.permute.xlu0 %1261
      %vm1264 = vcmask 523648
      %1265 = vst.msk [vmem:[#allocation5] sm:$0xff] %vm1264, %v1262
      %v1266 = vld [vmem:[#allocation5] sm:$0xff]
      %v1267 = vpack.c.bf16 %v1266, %v1266
      %v1268 = vld [vmem:[%s3] sm:$0xf]
      %v1269 = vld [vmem:[%s3 + $0x4] sm:$0xf]
      %v1270 = vld [vmem:[%s3 + $0x8] sm:$0xf]
      %v1271 = vld [vmem:[%s3 + $0xc] sm:$0xf]
      %v1272 = vld [vmem:[%s3 + $0x10] sm:$0xf]
      %v1273 = vld [vmem:[%s3 + $0x14] sm:$0xf]
      %v1274 = vld [vmem:[%s3 + $0x18] sm:$0xf]
      %v1275 = vld [vmem:[%s3 + $0x1c] sm:$0xf]
      %v1276 = vld [vmem:[%s4] sm:$0x1]
      %v1278 = vlaneseq
      %v1279 = vshrl.u32 %v1278, 7
      %v1280 = vsub.s32 0, %v1279
      %v1281 = vrot.slane %v1276, %v1280
      %v1291 = vunpack.c.l.b16 %v1268
      %v1292 = vunpack.c.l.b16 %v1269
      %v1293 = vunpack.c.l.b16 %v1270
      %v1294 = vunpack.c.l.b16 %v1271
      %v1295 = vunpack.c.l.b16 %v1272
      %v1296 = vunpack.c.l.b16 %v1273
      %v1297 = vunpack.c.l.b16 %v1274
      %v1298 = vunpack.c.l.b16 %v1275
      %v1299 = vpack.c.b16 %v1292, %v1291
      %v1300 = vpack.c.b16 %v1294, %v1293
      %v1301 = vpack.c.b16 %v1296, %v1295
      %v1302 = vpack.c.b16 %v1298, %v1297
      %v1308 = vsel %vm325, %v1267, 0
      %1310 = vmatprep.subr.bf16.mxu0 0
      %1311 = vmatpush1.bf16.msra.mxu0 %v1299
      %1312 = vmatprep.subr.bf16.mxu0 0
      %1313 = vmatpush1.bf16.msra.mxu0 %v1300
      %1314 = vmatprep.subr.bf16.mxu0 0
      %1315 = vmatpush1.bf16.msra.mxu0 %v1301
      %1316 = vmatprep.subr.bf16.mxu0 0
      %1317 = vmatpush1.bf16.msra.mxu0 %v1302
      %1318 = vmatprep.subr.bf16.mxu0 0
      %1319 = vmatpush1.bf16.msra.mxu0 0
      %1320 = vmatprep.subr.bf16.mxu0 0
      %1321 = vmatpush1.bf16.msra.mxu0 0
      %1322 = vmatprep.subr.bf16.mxu0 0
      %1323 = vmatpush1.bf16.msra.mxu0 0
      %1324 = vmatprep.subr.bf16.mxu0 0
      %1325 = vmatpush1.bf16.msra.mxu0 0
      %1326 = vmatprep.subr.bf16.mxu0 0
      %1327 = vmatpush1.bf16.msra.mxu0 0
      %1328 = vmatprep.subr.bf16.mxu0 0
      %1329 = vmatpush1.bf16.msra.mxu0 0
      %1330 = vmatprep.subr.bf16.mxu0 0
      %1331 = vmatpush1.bf16.msra.mxu0 0
      %1332 = vmatprep.subr.bf16.mxu0 0
      %1333 = vmatpush1.bf16.msra.mxu0 0
      %1334 = vmatprep.subr.bf16.mxu0 0
      %1335 = vmatpush1.bf16.msra.mxu0 0
      %1336 = vmatprep.subr.bf16.mxu0 0
      %1337 = vmatpush1.bf16.msra.mxu0 0
      %1338 = vmatprep.subr.bf16.mxu0 0
      %1339 = vmatpush1.bf16.msra.mxu0 0
      %1340 = vmatprep.subr.bf16.mxu0 0
      %1341 = vmatpush1.bf16.msra.mxu0 0
      %1342 = vmatprep.mubr.bf16.mxu0 0
      %1343 = vmatmul.mubr.bf16.gmra.mrb[0].mxu0 %v1308
      %v1344 = vpop.f32.mrb[0].mxu0
      %v1345 = vadd.f32 %v1281, %v1344
      %v1346 = vpop.f32.mrb[0].mxu0
      %v1347 = vpop.f32.mrb[0].mxu0
      %v1348 = vpop.f32.mrb[0].mxu0
      %1349 = vdwg.mxu0
      %v1350 = vadd.f32 %v275, %v1345
      %v1351 = vsel %vm325, %v1350, 0.0
      %1352 = vadd.xlane.f32.xlu0 %v1351
      %v1353 = vpop.xlane.xlu0 %1352
      %v1354 = vrcp.pop 64.0
      %v1355 = vmul.f32 %v1353, %v1354
      %v1356 = vsub.f32 %v1350, %v1355
      %v1357 = vmul.f32 %v1356, %v1356
      %v1358 = vsel %vm325, %v1357, 0.0
      %1359 = vadd.xlane.f32.xlu0 %v1358
      %v1360 = vpop.xlane.xlu0 %1359
      %v1361 = vmul.f32 %v1360, %v1354
      %v1362 = vadd.f32 %v1361, 1e-05
      %v1363 = vrsqrt.pop %v1362
      %v1364 = vmul.f32 %v1356, %v1363
      %v1365 = vld [vmem:[%s5] sm:$0x1]
      %v1367 = vlaneseq
      %v1368 = vshrl.u32 %v1367, 7
      %v1369 = vsub.s32 0, %v1368
      %v1370 = vrot.slane %v1365, %v1369
      %v1372 = vmul.f32 %v1364, %v1370
      %v1373 = vld [vmem:[%s6] sm:$0x1]
      %v1375 = vlaneseq
      %v1376 = vshrl.u32 %v1375, 7
      %v1377 = vsub.s32 0, %v1376
      %v1378 = vrot.slane %v1373, %v1377
      %v1380 = vadd.f32 %v1372, %v1378
      %1381 = vst.msk [vmem:[%s273] sm:$0xff] %vm325, %v1380
      %p1382 = scmp.lt.s32.totalorder %s18, 1
      %s1383 = scalar_select %p1382, %s18, 1
      %s1384 = smul.addr %s1383, 8
      %s1385 = scalar_lea.vmem %s7, %s1384
      // Predicated region
      $region49: #{block_forward.2} parent=47 // pred_check
        %p1386 = pneg %p188
      $region50: #{block_forward.2} parent=47 // pred_check_branch
        %1388 = sbr.rel (%p1386) target = $region52
      $region51: #{block_forward.2} parent=47 // pred_region
        _
      $region52: #{block_forward.2} parent=47 // pred_fallthru
        _
    $region48: #{block_forward.2} parent=5 // pred_fallthru
      _
    %p1389 = scmp.le.s32.totalorder 2, %s13
    // Predicated region
    $region53: #{block_forward.2} parent=5 // pred_check
      %p1390 = pneg %p1389
    $region54: #{block_forward.2} parent=5 // pred_check_branch
      %1392 = sbr.rel (%p1390) target = $region56
    $region55: #{block_forward.2} parent=5 // pred_region
      %s1393 = ssub.s32 %s13, 2
      // Predicated region
      $region57: #{block_forward.2} parent=55 // pred_check
        %p1394 = pneg %p194
      $region58: #{block_forward.2} parent=55 // pred_check_branch
        %1396 = sbr.rel (%p1394) target = $region60
      $region59: #{block_forward.2} parent=55 // pred_region
        %p1397 = scmp.lt.s32.totalorder %s19, 1
        %s1398 = scalar_select %p1397, %s19, 1
        %s1399 = smul.addr %s1398, 8
        %s1400 = scalar_lea.vmem %s7, %s1399
      $region60: #{block_forward.2} parent=55 // pred_fallthru
        _
    $region56: #{block_forward.2} parent=5 // pred_fallthru
      _
  $region6: #{block_forward.2} parent=0 // loop_footer
    %s17 = sadd.s32 1, %s13
  $region7: #{block_forward.2} parent=0 // loop_footer_branch
    %12 = sbr.rel target = $region3
  $region8: #{block_forward.2} parent=0 // loop_exit
    _

</llo_original>
